<compile_context>
chip_gen: v7x
topology: tpu7x:2x2x1
jax: 0.10.0
libtpu: 0.0.40
codegen_flags: <defaults>
</compile_context>

<pallas_src>
import functools

import jax
import jax.numpy as jnp
from jax.experimental import pallas as pl
from jax.experimental.pallas import tpu as pltpu


# ----------------------------------------------------------------------------
# Shape helpers
# ----------------------------------------------------------------------------
def _round_up(n, m):
    return ((n + m - 1) // m) * m


def _derive_dims(data_size):
    """Hidden widths and 128-lane-padded layout constants for a given data_size."""
    assert data_size % 128 == 0, "data_size must be a multiple of 128"
    d = data_size
    h1, h2, h3 = d // 8, d // 32, d // 128          # matches int(data_size / k)
    n1 = _round_up(h1, 128)                         # lane-padded layer widths
    n2 = _round_up(h2, 128)
    n3 = _round_up(h3, 128)
    rows_a = d + n1 + n2 + n3 + n2                  # rows of packed weight slab A
    return h1, h2, h3, n1, n2, n3, rows_a


def _choose_block_rows(b, block_rows):
    """Largest multiple-of-16 batch tile <= block_rows that (a) keeps >= 2 grid steps
    when the batch allows it (v7x has 2 TensorCores) and (b) divides b when possible
    so no padding copy of x is needed."""
    block_rows = max(16, (block_rows // 16) * 16)
    cap = min(block_rows, max(16, _round_up((b + 1) // 2, 16)))
    for cand in range(cap, 15, -16):
        if b % cand == 0:
            return cand
    return cap


# ----------------------------------------------------------------------------
# Kernel
# ----------------------------------------------------------------------------
def _autoencoder_kernel(dims, x_ref, wa_ref, wo_ref, ba_ref, mb_ref, mdc_ref, y_ref):
    d, n1, n2, n3, c, cpad = dims
    o2 = d                      # row offsets of W2..W5 inside slab A (128-aligned)
    o3 = o2 + n1
    o4 = o3 + n2
    o5 = o4 + n3
    f32, bf16 = jnp.float32, jnp.bfloat16

    x = x_ref[...]                                                         # (TB, D) bf16

    # --- encoder: Linear -> Tanh -> Linear -> Tanh -> Linear -----------------
    h = jnp.dot(x, wa_ref[0:d, 0:n1], preferred_element_type=f32) + ba_ref[0:1, 0:n1]
    h = jnp.tanh(h).astype(bf16)                                           # (TB, n1)
    h = jnp.dot(h, wa_ref[o2:o2 + n1, 0:n2],
                preferred_element_type=f32) + ba_ref[1:2, 0:n2]
    h = jnp.tanh(h).astype(bf16)                                           # (TB, n2)
    z = jnp.dot(h, wa_ref[o3:o3 + n2, 0:n3],
                preferred_element_type=f32) + ba_ref[2:3, 0:n3]            # latent (f32)

    # --- decoder: Linear -> Tanh -> Linear -> Tanh -> Linear -----------------
    h = jnp.dot(z, wa_ref[o4:o4 + n3, 0:n2].astype(f32),
                preferred_element_type=f32) + ba_ref[3:4, 0:n2]
    h = jnp.tanh(h).astype(bf16)                                           # (TB, n2)
    h = jnp.dot(h, wa_ref[o5:o5 + n2, 0:n1],
                preferred_element_type=f32) + ba_ref[4:5, 0:n1]
    h = jnp.tanh(h).astype(bf16)                                           # (TB, n1)
    y = jnp.dot(h, wo_ref[...], preferred_element_type=f32) \
        + mb_ref[cpad + c + 1:cpad + c + 2, :]                             # + b6 -> (TB, D)

    # --- segmented per-category softmax (Softmax(dim=0) on each feature slice) ---
    in_any = mb_ref[cpad + c:cpad + c + 1, :] > 0.5                        # (1, D)

    # per-category max, scattered back to feature lanes (additive -BIG mask precomputed)
    m_feat = jnp.zeros_like(y)
    for cc in range(c):                                                    # static, small C
        m_row = jnp.max(y + mb_ref[cpad + cc:cpad + cc + 1, :], axis=-1, keepdims=True)
        m_feat = m_feat + mb_ref[cc:cc + 1, :] * m_row

    e = jnp.exp(jnp.where(in_any, y - m_feat, 0.0))                        # one exp pass

    # per-category sums and 1/sum scatter ride the (otherwise idle) MXU
    s = jnp.dot(e, mdc_ref[...], preferred_element_type=f32)               # (TB, Cp)
    s = jnp.where(s > 0.0, s, 1.0)                                         # empty/pad cats
    inv_feat = jnp.dot(1.0 / s, mb_ref[0:cpad, :],                         # exact recip
                       preferred_element_type=f32)                         # (TB, D)

    y_ref[...] = jnp.where(in_any, e * inv_feat, y)


# ----------------------------------------------------------------------------
# Wrapper
# ----------------------------------------------------------------------------
def autoencoder_forward(x, w_slab, w_out, b_slab, mask_slab, masks_dc, *, block_rows=256):
    """x: (D,) or (B, D) float.  block_rows: max batch tile (256 fills v6e/v7x MXU)."""
    squeeze = x.ndim == 1
    x2 = (x[None, :] if squeeze else x).astype(jnp.bfloat16)   # bf16 streaming of x
    b, d = x2.shape
    _, _, _, n1, n2, n3, rows_a = _derive_dims(d)
    cpad = masks_dc.shape[1]
    c = mask_slab.shape[0] - cpad - 2
    assert w_slab.shape == (rows_a, n1)
    assert w_out.shape == (n1, d)
    assert b_slab.shape == (8, n1)
    assert mask_slab.shape == (cpad + c + 2, d) and masks_dc.shape == (d, cpad)

    block_b = _choose_block_rows(b, block_rows)
    bp = _round_up(b, block_b)
    if bp != b:                      # only for ragged batches; divisor search avoids this
        x2 = jnp.pad(x2, ((0, bp - b), (0, 0)))

    # Constant operands: VMEM-resident, single-buffered (their index_map never changes).
    def _const(shape):
        return pl.BlockSpec(shape, lambda i: (0, 0),
                            pipeline_mode=pl.Buffered(buffer_count=1))

    w_bytes = sum(int(a.size) * a.dtype.itemsize
                  for a in (w_slab, w_out, b_slab, mask_slab, masks_dc))
    est = w_bytes + 2 * block_b * d * (2 + 4) + 8 * block_b * max(d, n1) * 4
    mosaic_kwargs = dict(dimension_semantics=("parallel",))    # batch axis -> megacore
    if est > 12 * 1024 * 1024:
        try:
            phys = pltpu.get_tpu_info().vmem_capacity_bytes    # 64 MiB/TC on v7x
        except Exception:
            phys = 64 * 1024 * 1024                            # conservative fallback
        mosaic_kwargs["vmem_limit_bytes"] = int(
            min(phys - (4 << 20), max(est * 3 // 2, 16 << 20)))

    mm = [(d, n1), (n1, n2), (n2, n3), (n3, n2), (n2, n1), (n1, d), (d, cpad), (cpad, d)]
    cost = pl.CostEstimate(
        flops=int(2 * bp * sum(k * n for k, n in mm)),
        transcendentals=int(bp * (2 * (n1 + n2) + d + cpad)),
        bytes_accessed=int(x2.size * x2.dtype.itemsize + bp * d * 4 + w_bytes))

    dims = (d, n1, n2, n3, c, cpad)
    y = pl.pallas_call(
        functools.partial(_autoencoder_kernel, dims),
        out_shape=jax.ShapeDtypeStruct((bp, d), jnp.float32),
        grid=(bp // block_b,),
        in_specs=[
            pl.BlockSpec((block_b, d), lambda i: (i, 0)),   # x: tiled over batch (bf16)
            _const((rows_a, n1)),                           # packed W1..W5 (bf16)
            _const((n1, d)),                                # W6 (bf16)
            _const((8, n1)),                                # packed biases b1..b5 (f32)
            _const((cpad + c + 2, d)),                      # masks / -BIG masks / in_any / b6
            _const((d, cpad)),                              # pre-transposed masks (f32)
        ],
        out_specs=pl.BlockSpec((block_b, d), lambda i: (i, 0)),
        compiler_params=pltpu.CompilerParams(**mosaic_kwargs),
        cost_estimate=cost,
    )(x2, w_slab, w_out, b_slab, mask_slab, masks_dc)

    y = y[:b]
    return y[0] if squeeze else y


# ----------------------------------------------------------------------------
# Deterministic parameter construction (Xavier-uniform weights, zero biases)
# ----------------------------------------------------------------------------
def make_params(key, data_size):
    """Raw f32 params; weights stored as (in_features, out_features)."""
    h1, h2, h3 = data_size // 8, data_size // 32, data_size // 128
    layer_dims = [(data_size, h1), (h1, h2), (h2, h3),        # encoder
                  (h3, h2), (h2, h1), (h1, data_size)]        # decoder
    raw = []
    for fan_in, fan_out in layer_dims:
        key, sub = jax.random.split(key)
        bound = (6.0 / (fan_in + fan_out)) ** 0.5
        w = jax.random.uniform(sub, (fan_in, fan_out), jnp.float32, -bound, bound)
        b = jnp.zeros((fan_out,), jnp.float32)
        raw.append((w, b))
    return raw


def pack_params(raw_params, data_size):
    """Pack the 6 Linear layers: bf16 slab A (W1..W5), bf16 W6, f32 bias slab, b6.
    All padded rows/cols/lanes are exactly zero (required for padded exactness)."""
    d = data_size
    h1, h2, h3, n1, n2, n3, rows_a = _derive_dims(d)
    (w1, b1), (w2, b2), (w3, b3), (w4, b4), (w5, b5), (w6, b6) = raw_params
    o2, o3, o4, o5 = d, d + n1, d + n1 + n2, d + n1 + n2 + n3

    wa = jnp.zeros((rows_a, n1), jnp.float32)
    wa = wa.at[0:d, 0:h1].set(w1)
    wa = wa.at[o2:o2 + h1, 0:h2].set(w2)
    wa = wa.at[o3:o3 + h2, 0:h3].set(w3)
    wa = wa.at[o4:o4 + h3, 0:h2].set(w4)
    wa = wa.at[o5:o5 + h2, 0:h1].set(w5)
    wa = wa.astype(jnp.bfloat16)

    wo = jnp.zeros((n1, d), jnp.float32).at[0:h1, :].set(w6).astype(jnp.bfloat16)

    ba = jnp.zeros((8, n1), jnp.float32)
    for row, (bias, width) in enumerate([(b1, h1), (b2, h2), (b3, h3), (b4, h2), (b5, h1)]):
        ba = ba.at[row, 0:width].set(bias)

    return wa, wo, ba, b6


def make_mask_slabs(categories, b6, data_size):
    """mask_slab rows: [0, Cp) 0/1 category masks, [Cp, Cp+C) additive (mask-1)*1e30
    masks, row Cp+C = in-any-category indicator, row Cp+C+1 = last-layer bias b6.
    masks_dc is the (D, Cp) pre-transposed 0/1 mask for the per-category-sum matmul."""
    d = data_size
    c = len(categories)
    cpad = _round_up(max(c, 1), 128)
    masks = jnp.zeros((cpad, d), jnp.float32)
    for i, r in enumerate(categories):
        masks = masks.at[i, r["start"]:r["end"]].set(1.0)
    negmask = (masks[:c] - 1.0) * 1e30
    in_any = (jnp.sum(masks, axis=0, keepdims=True) > 0.5).astype(jnp.float32)
    slab = jnp.concatenate(
        [masks, negmask, in_any, b6.astype(jnp.float32)[None, :]], axis=0)
    return slab, masks.T


# ----------------------------------------------------------------------------
# Pure-JAX f32 reference (mirrors the PyTorch forward exactly, single vector)
# ----------------------------------------------------------------------------
def reference_forward(x, raw_params, categories):
    (w1, b1), (w2, b2), (w3, b3), (w4, b4), (w5, b5), (w6, b6) = raw_params
    y = jnp.tanh(x @ w1 + b1)
    y = jnp.tanh(y @ w2 + b2)
    y = y @ w3 + b3
    y = jnp.tanh(y @ w4 + b4)
    y = jnp.tanh(y @ w5 + b5)
    y = y @ w6 + b6
    for r in categories:
        s, e = r["start"], r["end"]
        y = y.at[s:e].set(jax.nn.softmax(y[s:e], axis=0))
    return y


# ----------------------------------------------------------------------------
if __name__ == "__main__":
    data_size = 256  # hidden widths D/8, D/32, D/128 imply D % 128 == 0
    categories = [
        {"start": 0, "end": 100},
        {"start": 100, "end": 180},
        {"start": 180, "end": 240},   # features 240..255 stay un-softmaxed
    ]
    batch = 256  # gives a 2-step "parallel" grid (block_b = 128), no padding copy

    key = jax.random.PRNGKey(0)
    key, kx = jax.random.split(key)
    x = jax.random.normal(kx, (batch, data_size), jnp.float32)

    raw_params = make_params(key, data_size)
    w_slab, w_out, b_slab, b6 = pack_params(raw_params, data_size)
    mask_slab, masks_dc = make_mask_slabs(categories, b6, data_size)

    y = autoencoder_forward(x, w_slab, w_out, b_slab, mask_slab, masks_dc)
    y = jax.block_until_ready(y)

    # f32 reference applied row-wise (original module semantics per 1-D vector).
    y_ref = jax.vmap(lambda xi: reference_forward(xi, raw_params, categories))(x)
    assert y.shape == y_ref.shape
    # bf16 weights/activations -> loosened tolerance.
    assert bool(jnp.allclose(y, y_ref, atol=5e-2, rtol=5e-2)), "batched mismatch vs reference"

    # Single-vector path == the original forward(x) signature.
    y1 = jax.block_until_ready(
        autoencoder_forward(x[0], w_slab, w_out, b_slab, mask_slab, masks_dc))
    assert bool(jnp.allclose(y1, y_ref[0], atol=5e-2, rtol=5e-2)), "1-D mismatch vs reference"

    print("KERNEL_OK")
</pallas_src>

<mosaic_0001>
module attributes {stable_mosaic.version = 11 : i64} {
  func.func @_autoencoder_kernel(%arg0: i32, %arg1: memref<128x256xbf16, #tpu.memory_space<vmem>>, %arg2: memref<768x128xbf16, #tpu.memory_space<vmem>>, %arg3: memref<128x256xbf16, #tpu.memory_space<vmem>>, %arg4: memref<8x128xf32, #tpu.memory_space<vmem>>, %arg5: memref<133x256xf32, #tpu.memory_space<vmem>>, %arg6: memref<256x128xf32, #tpu.memory_space<vmem>>, %arg7: memref<128x256xf32, #tpu.memory_space<vmem>>) attributes {dimension_semantics = [#tpu.dimension_semantics<parallel>], iteration_bounds = array<i64: 2>, scalar_prefetch = 0 : i64, scratch_operands = 0 : i64, tpu.core_type = #tpu.core_type<tc>, window_params = [{transform_indices = @transform_0, window_bounds = array<i64: 128, 256>}, {pipeline_mode = #tpu.pipeline_mode<synchronous>, transform_indices = @transform_1, window_bounds = array<i64: 768, 128>}, {pipeline_mode = #tpu.pipeline_mode<synchronous>, transform_indices = @transform_2, window_bounds = array<i64: 128, 256>}, {pipeline_mode = #tpu.pipeline_mode<synchronous>, transform_indices = @transform_3, window_bounds = array<i64: 8, 128>}, {pipeline_mode = #tpu.pipeline_mode<synchronous>, transform_indices = @transform_4, window_bounds = array<i64: 133, 256>}, {pipeline_mode = #tpu.pipeline_mode<synchronous>, transform_indices = @transform_5, window_bounds = array<i64: 256, 128>}, {transform_indices = @transform_6, window_bounds = array<i64: 128, 256>}]} {
    %c0 = arith.constant 0 : index
    %c0_0 = arith.constant 0 : index
    %0 = vector.load %arg1[%c0, %c0_0] : memref<128x256xbf16, #tpu.memory_space<vmem>>, vector<128x256xbf16>
    %c0_1 = arith.constant 0 : index
    %c0_2 = arith.constant 0 : index
    %1 = vector.load %arg2[%c0_1, %c0_2] : memref<768x128xbf16, #tpu.memory_space<vmem>>, vector<256x128xbf16>
    %cst = arith.constant dense<0.000000e+00> : vector<128x128xf32>
    %2 = tpu.matmul %0, %1, %cst {dimension_numbers = #tpu.dot_dimension_numbers<[1], [0], [0], [1], [0, 0, 1, 1], [], []>} : vector<128x256xbf16>, vector<256x128xbf16>, vector<128x128xf32> -> vector<128x128xf32>
    %c0_3 = arith.constant 0 : index
    %c0_4 = arith.constant 0 : index
    %3 = vector.load %arg4[%c0_3, %c0_4] : memref<8x128xf32, #tpu.memory_space<vmem>>, vector<1x128xf32>
    %4 = vector.broadcast %3 : vector<1x128xf32> to vector<128x128xf32>
    %5 = arith.addf %2, %4 : vector<128x128xf32>
    %6 = math.tanh %5 : vector<128x128xf32>
    %7 = arith.truncf %6 : vector<128x128xf32> to vector<128x128xbf16>
    %c256 = arith.constant 256 : index
    %c0_5 = arith.constant 0 : index
    %8 = vector.load %arg2[%c256, %c0_5] : memref<768x128xbf16, #tpu.memory_space<vmem>>, vector<128x128xbf16>
    %cst_6 = arith.constant dense<0.000000e+00> : vector<128x128xf32>
    %9 = tpu.matmul %7, %8, %cst_6 {dimension_numbers = #tpu.dot_dimension_numbers<[1], [0], [0], [1], [0, 0, 1, 1], [], []>} : vector<128x128xbf16>, vector<128x128xbf16>, vector<128x128xf32> -> vector<128x128xf32>
    %c1 = arith.constant 1 : index
    %c0_7 = arith.constant 0 : index
    %10 = vector.load %arg4[%c1, %c0_7] : memref<8x128xf32, #tpu.memory_space<vmem>>, vector<1x128xf32>
    %11 = vector.broadcast %10 : vector<1x128xf32> to vector<128x128xf32>
    %12 = arith.addf %9, %11 : vector<128x128xf32>
    %13 = math.tanh %12 : vector<128x128xf32>
    %14 = arith.truncf %13 : vector<128x128xf32> to vector<128x128xbf16>
    %c384 = arith.constant 384 : index
    %c0_8 = arith.constant 0 : index
    %15 = vector.load %arg2[%c384, %c0_8] : memref<768x128xbf16, #tpu.memory_space<vmem>>, vector<128x128xbf16>
    %cst_9 = arith.constant dense<0.000000e+00> : vector<128x128xf32>
    %16 = tpu.matmul %14, %15, %cst_9 {dimension_numbers = #tpu.dot_dimension_numbers<[1], [0], [0], [1], [0, 0, 1, 1], [], []>} : vector<128x128xbf16>, vector<128x128xbf16>, vector<128x128xf32> -> vector<128x128xf32>
    %c2 = arith.constant 2 : index
    %c0_10 = arith.constant 0 : index
    %17 = vector.load %arg4[%c2, %c0_10] : memref<8x128xf32, #tpu.memory_space<vmem>>, vector<1x128xf32>
    %18 = vector.broadcast %17 : vector<1x128xf32> to vector<128x128xf32>
    %19 = arith.addf %16, %18 : vector<128x128xf32>
    %c512 = arith.constant 512 : index
    %c0_11 = arith.constant 0 : index
    %20 = vector.load %arg2[%c512, %c0_11] : memref<768x128xbf16, #tpu.memory_space<vmem>>, vector<128x128xbf16>
    %21 = arith.extf %20 : vector<128x128xbf16> to vector<128x128xf32>
    %cst_12 = arith.constant dense<0.000000e+00> : vector<128x128xf32>
    %22 = tpu.matmul %19, %21, %cst_12 {dimension_numbers = #tpu.dot_dimension_numbers<[1], [0], [0], [1], [0, 0, 1, 1], [], []>} : vector<128x128xf32>, vector<128x128xf32>, vector<128x128xf32> -> vector<128x128xf32>
    %c3 = arith.constant 3 : index
    %c0_13 = arith.constant 0 : index
    %23 = vector.load %arg4[%c3, %c0_13] : memref<8x128xf32, #tpu.memory_space<vmem>>, vector<1x128xf32>
    %24 = vector.broadcast %23 : vector<1x128xf32> to vector<128x128xf32>
    %25 = arith.addf %22, %24 : vector<128x128xf32>
    %26 = math.tanh %25 : vector<128x128xf32>
    %27 = arith.truncf %26 : vector<128x128xf32> to vector<128x128xbf16>
    %c640 = arith.constant 640 : index
    %c0_14 = arith.constant 0 : index
    %28 = vector.load %arg2[%c640, %c0_14] : memref<768x128xbf16, #tpu.memory_space<vmem>>, vector<128x128xbf16>
    %cst_15 = arith.constant dense<0.000000e+00> : vector<128x128xf32>
    %29 = tpu.matmul %27, %28, %cst_15 {dimension_numbers = #tpu.dot_dimension_numbers<[1], [0], [0], [1], [0, 0, 1, 1], [], []>} : vector<128x128xbf16>, vector<128x128xbf16>, vector<128x128xf32> -> vector<128x128xf32>
    %c4 = arith.constant 4 : index
    %c0_16 = arith.constant 0 : index
    %30 = vector.load %arg4[%c4, %c0_16] : memref<8x128xf32, #tpu.memory_space<vmem>>, vector<1x128xf32>
    %31 = vector.broadcast %30 : vector<1x128xf32> to vector<128x128xf32>
    %32 = arith.addf %29, %31 : vector<128x128xf32>
    %33 = math.tanh %32 : vector<128x128xf32>
    %34 = arith.truncf %33 : vector<128x128xf32> to vector<128x128xbf16>
    %c0_17 = arith.constant 0 : index
    %c0_18 = arith.constant 0 : index
    %35 = vector.load %arg3[%c0_17, %c0_18] : memref<128x256xbf16, #tpu.memory_space<vmem>>, vector<128x256xbf16>
    %cst_19 = arith.constant dense<0.000000e+00> : vector<128x256xf32>
    %36 = tpu.matmul %34, %35, %cst_19 {dimension_numbers = #tpu.dot_dimension_numbers<[1], [0], [0], [1], [0, 0, 1, 1], [], []>} : vector<128x128xbf16>, vector<128x256xbf16>, vector<128x256xf32> -> vector<128x256xf32>
    %c132 = arith.constant 132 : index
    %c0_20 = arith.constant 0 : index
    %37 = vector.load %arg5[%c132, %c0_20] : memref<133x256xf32, #tpu.memory_space<vmem>>, vector<1x256xf32>
    %38 = vector.broadcast %37 : vector<1x256xf32> to vector<128x256xf32>
    %39 = arith.addf %36, %38 : vector<128x256xf32>
    %c131 = arith.constant 131 : index
    %c0_21 = arith.constant 0 : index
    %40 = vector.load %arg5[%c131, %c0_21] : memref<133x256xf32, #tpu.memory_space<vmem>>, vector<1x256xf32>
    %cst_22 = arith.constant 5.000000e-01 : f32
    %41 = vector.broadcast %cst_22 : f32 to vector<1x256xf32>
    %42 = arith.cmpf ogt, %40, %41 : vector<1x256xf32>
    %cst_23 = arith.constant 0.000000e+00 : f32
    %43 = vector.broadcast %cst_23 : f32 to vector<128x256xf32>
    %c128 = arith.constant 128 : index
    %c0_24 = arith.constant 0 : index
    %44 = vector.load %arg5[%c128, %c0_24] : memref<133x256xf32, #tpu.memory_space<vmem>>, vector<1x256xf32>
    %45 = vector.broadcast %44 : vector<1x256xf32> to vector<128x256xf32>
    %46 = arith.addf %39, %45 : vector<128x256xf32>
    %cst_25 = arith.constant dense<0xFF800000> : vector<128xf32>
    %47 = vector.multi_reduction <maximumf>, %46, %cst_25 [1] : vector<128x256xf32> to vector<128xf32>
    %48 = vector.shape_cast %47 : vector<128xf32> to vector<128x1xf32>
    %c0_26 = arith.constant 0 : index
    %c0_27 = arith.constant 0 : index
    %49 = vector.load %arg5[%c0_26, %c0_27] : memref<133x256xf32, #tpu.memory_space<vmem>>, vector<1x256xf32>
    %50 = vector.broadcast %49 : vector<1x256xf32> to vector<128x256xf32>
    %51 = vector.broadcast %48 : vector<128x1xf32> to vector<128x256xf32>
    %52 = arith.mulf %50, %51 : vector<128x256xf32>
    %53 = arith.addf %43, %52 : vector<128x256xf32>
    %c129 = arith.constant 129 : index
    %c0_28 = arith.constant 0 : index
    %54 = vector.load %arg5[%c129, %c0_28] : memref<133x256xf32, #tpu.memory_space<vmem>>, vector<1x256xf32>
    %55 = vector.broadcast %54 : vector<1x256xf32> to vector<128x256xf32>
    %56 = arith.addf %39, %55 : vector<128x256xf32>
    %cst_29 = arith.constant dense<0xFF800000> : vector<128xf32>
    %57 = vector.multi_reduction <maximumf>, %56, %cst_29 [1] : vector<128x256xf32> to vector<128xf32>
    %58 = vector.shape_cast %57 : vector<128xf32> to vector<128x1xf32>
    %c1_30 = arith.constant 1 : index
    %c0_31 = arith.constant 0 : index
    %59 = vector.load %arg5[%c1_30, %c0_31] : memref<133x256xf32, #tpu.memory_space<vmem>>, vector<1x256xf32>
    %60 = vector.broadcast %59 : vector<1x256xf32> to vector<128x256xf32>
    %61 = vector.broadcast %58 : vector<128x1xf32> to vector<128x256xf32>
    %62 = arith.mulf %60, %61 : vector<128x256xf32>
    %63 = arith.addf %53, %62 : vector<128x256xf32>
    %c130 = arith.constant 130 : index
    %c0_32 = arith.constant 0 : index
    %64 = vector.load %arg5[%c130, %c0_32] : memref<133x256xf32, #tpu.memory_space<vmem>>, vector<1x256xf32>
    %65 = vector.broadcast %64 : vector<1x256xf32> to vector<128x256xf32>
    %66 = arith.addf %39, %65 : vector<128x256xf32>
    %cst_33 = arith.constant dense<0xFF800000> : vector<128xf32>
    %67 = vector.multi_reduction <maximumf>, %66, %cst_33 [1] : vector<128x256xf32> to vector<128xf32>
    %68 = vector.shape_cast %67 : vector<128xf32> to vector<128x1xf32>
    %c2_34 = arith.constant 2 : index
    %c0_35 = arith.constant 0 : index
    %69 = vector.load %arg5[%c2_34, %c0_35] : memref<133x256xf32, #tpu.memory_space<vmem>>, vector<1x256xf32>
    %70 = vector.broadcast %69 : vector<1x256xf32> to vector<128x256xf32>
    %71 = vector.broadcast %68 : vector<128x1xf32> to vector<128x256xf32>
    %72 = arith.mulf %70, %71 : vector<128x256xf32>
    %73 = arith.addf %63, %72 : vector<128x256xf32>
    %74 = arith.subf %39, %73 : vector<128x256xf32>
    %cst_36 = arith.constant 0.000000e+00 : f32
    %75 = vector.shape_cast %42 : vector<1x256xi1> to vector<1x256xi1>
    %76 = vector.broadcast %75 : vector<1x256xi1> to vector<128x256xi1>
    %77 = vector.broadcast %cst_36 : f32 to vector<128x256xf32>
    %78 = arith.select %76, %74, %77 : vector<128x256xi1>, vector<128x256xf32>
    %79 = math.exp %78 : vector<128x256xf32>
    %c0_37 = arith.constant 0 : index
    %c0_38 = arith.constant 0 : index
    %80 = vector.load %arg6[%c0_37, %c0_38] : memref<256x128xf32, #tpu.memory_space<vmem>>, vector<256x128xf32>
    %cst_39 = arith.constant dense<0.000000e+00> : vector<128x128xf32>
    %81 = tpu.matmul %79, %80, %cst_39 {dimension_numbers = #tpu.dot_dimension_numbers<[1], [0], [0], [1], [0, 0, 1, 1], [], []>} : vector<128x256xf32>, vector<256x128xf32>, vector<128x128xf32> -> vector<128x128xf32>
    %cst_40 = arith.constant 0.000000e+00 : f32
    %82 = vector.broadcast %cst_40 : f32 to vector<128x128xf32>
    %83 = arith.cmpf ogt, %81, %82 : vector<128x128xf32>
    %cst_41 = arith.constant 1.000000e+00 : f32
    %84 = vector.broadcast %cst_41 : f32 to vector<128x128xf32>
    %85 = arith.select %83, %81, %84 : vector<128x128xi1>, vector<128x128xf32>
    %cst_42 = arith.constant 1.000000e+00 : f32
    %86 = vector.broadcast %cst_42 : f32 to vector<128x128xf32>
    %87 = arith.divf %86, %85 : vector<128x128xf32>
    %c0_43 = arith.constant 0 : index
    %c0_44 = arith.constant 0 : index
    %88 = vector.load %arg5[%c0_43, %c0_44] : memref<133x256xf32, #tpu.memory_space<vmem>>, vector<128x256xf32>
    %cst_45 = arith.constant dense<0.000000e+00> : vector<128x256xf32>
    %89 = tpu.matmul %87, %88, %cst_45 {dimension_numbers = #tpu.dot_dimension_numbers<[1], [0], [0], [1], [0, 0, 1, 1], [], []>} : vector<128x128xf32>, vector<128x256xf32>, vector<128x256xf32> -> vector<128x256xf32>
    %90 = arith.mulf %79, %89 : vector<128x256xf32>
    %91 = vector.shape_cast %42 : vector<1x256xi1> to vector<1x256xi1>
    %92 = vector.broadcast %91 : vector<1x256xi1> to vector<128x256xi1>
    %93 = arith.select %92, %90, %39 : vector<128x256xi1>, vector<128x256xf32>
    %c0_46 = arith.constant 0 : index
    %c0_47 = arith.constant 0 : index
    %94 = vector.load %arg7[%c0_46, %c0_47] : memref<128x256xf32, #tpu.memory_space<vmem>>, vector<128x256xf32>
    tpu.vector_store %arg7[%c0_46, %c0_47], %93 {strides = array<i32>} : memref<128x256xf32, #tpu.memory_space<vmem>>, vector<128x256xf32>,
    return
  }
  func.func @transform_0(%arg0: i32) -> (i32, i32) {
    %c0_i32 = arith.constant 0 : i32
    %c0_i32_0 = arith.constant 0 : i32
    return %arg0, %c0_i32 : i32, i32
  }
  func.func @transform_1(%arg0: i32) -> (i32, i32) {
    %c0_i32 = arith.constant 0 : i32
    %c0_i32_0 = arith.constant 0 : i32
    %c0_i32_1 = arith.constant 0 : i32
    return %c0_i32, %c0_i32_0 : i32, i32
  }
  func.func @transform_2(%arg0: i32) -> (i32, i32) {
    %c0_i32 = arith.constant 0 : i32
    %c0_i32_0 = arith.constant 0 : i32
    %c0_i32_1 = arith.constant 0 : i32
    return %c0_i32, %c0_i32_0 : i32, i32
  }
  func.func @transform_3(%arg0: i32) -> (i32, i32) {
    %c0_i32 = arith.constant 0 : i32
    %c0_i32_0 = arith.constant 0 : i32
    %c0_i32_1 = arith.constant 0 : i32
    return %c0_i32, %c0_i32_0 : i32, i32
  }
  func.func @transform_4(%arg0: i32) -> (i32, i32) {
    %c0_i32 = arith.constant 0 : i32
    %c0_i32_0 = arith.constant 0 : i32
    %c0_i32_1 = arith.constant 0 : i32
    return %c0_i32, %c0_i32_0 : i32, i32
  }
  func.func @transform_5(%arg0: i32) -> (i32, i32) {
    %c0_i32 = arith.constant 0 : i32
    %c0_i32_0 = arith.constant 0 : i32
    %c0_i32_1 = arith.constant 0 : i32
    return %c0_i32, %c0_i32_0 : i32, i32
  }
  func.func @transform_6(%arg0: i32) -> (i32, i32) {
    %c0_i32 = arith.constant 0 : i32
    %c0_i32_0 = arith.constant 0 : i32
    return %arg0, %c0_i32 : i32, i32
  }
}

</mosaic_0001>

<llo_original>
// kernel: tpu_custom_call.1
$region0: #{tpu_custom_call.1}
  #allocation0 [shape = 'u32[]', space=smem, size = 0x4, offset = 0x4, fixed_abs, tag = 'smem constant byte address 0x4 - core index']
  #allocation1 [shape = 'u32[144,128]{1,0:T(1,128)}', space=vmem, size = 0x12000, scoped, tag = 'internal scratch']
  %s0 = inlined_call_operand.hbm [shape: bf16[256,256], index: 0, kind: input, shape index: {}]
  %s1 = inlined_call_operand.hbm [shape: bf16[768,128], index: 1, kind: input, shape index: {}]
  %s2 = inlined_call_operand.hbm [shape: bf16[128,256], index: 2, kind: input, shape index: {}]
  %s3 = inlined_call_operand.vmem [shape: f32[8,128], index: 3, kind: input, shape index: {}]
  %s4 = inlined_call_operand.hbm [shape: f32[133,256], index: 4, kind: input, shape index: {}]
  %s5 = inlined_call_operand.hbm [shape: f32[256,128], index: 5, kind: input, shape index: {}]
  %s6 = inlined_call_operand.hbm [shape: f32[256,256], index: 6, kind: output, shape index: {}]
  %s7 = sld [smem:[#allocation0]]
  $region77: #{tpu_custom_call.1} parent=0
    _
  %s9 = ssub.s32 1, %s7
  %s10 = scalar_select 0, %s9, %s7
  $region1: #{tpu_custom_call.1} parent=0
    #allocation2 [shape = 'u8[131072]{0}', space=vmem, size = 0x20000, scoped, tag = 'input window, operand 0']
    #allocation3 [shape = 's32[2]{0}', space=sflag, size = 0x8, scoped, tag = 'scoped memory for tpu_custom_call.1']
    #allocation4 [shape = 's32[2]{0}', space=sflag, size = 0x8, scoped, tag = 'scoped memory for tpu_custom_call.1']
    #allocation5 [shape = 'u8[196608]{0}', space=vmem, size = 0x30000, scoped, tag = 'input window, operand 1, single buffered']
    #allocation6 [shape = 's32[1]{0}', space=sflag, size = 0x4, scoped, tag = 'scoped memory for tpu_custom_call.1']
    #allocation7 [shape = 'u8[65536]{0}', space=vmem, size = 0x10000, scoped, tag = 'input window, operand 2, single buffered']
    #allocation8 [shape = 'u8[139264]{0}', space=vmem, size = 0x22000, scoped, tag = 'input window, operand 4, single buffered']
    #allocation9 [shape = 's32[1]{0}', space=sflag, size = 0x4, scoped, tag = 'scoped memory for tpu_custom_call.1']
    #allocation10 [shape = 'u8[131072]{0}', space=vmem, size = 0x20000, scoped, tag = 'input window, operand 5, single buffered']
    #allocation11 [shape = 'u8[262144]{0}', space=vmem, size = 0x40000, scoped, tag = 'output window, operand 0']
    %11 = vsyncpa [#allocation3], 0
    %s12 = scalar_lea.sflag [#allocation3], 1
    %13 = vsyncpa %s12, 0
    %14 = vsyncpa [#allocation6], 0
    %15 = vsyncpa [#allocation9], 0
    %16 = vsyncpa [#allocation4], 0
    %s17 = scalar_lea.sflag [#allocation4], 1
    %18 = vsyncpa %s17, 0
    loop: start=0, step=1, limit=4
    $region2: #{tpu_custom_call.1} parent=1 // loop_pre_header
      _
    $region3: #{tpu_custom_call.1} parent=1 // loop_header
      %s20 = sphi 0, %s24
      %p21 = scmp.ge.s32.totalorder %s20, 4
      %s30 = sphi 0, %s32
      %s33 = sphi 0, %s30
      %s34 = sphi 0, %s33
      %s50 = sphi 0, %s34
      %s54 = sphi 0, %s54
      %s56 = sphi 0, %s54
      %s57 = sphi 0, %s56
      %s71 = sphi 0, %s57
      %s75 = sphi 0, %s75
      %s77 = sphi 0, %s75
      %s78 = sphi 0, %s77
      %s92 = sphi 0, %s78
      %s96 = sphi 0, %s96
      %s98 = sphi 0, %s96
      %s99 = sphi 0, %s98
      %s113 = sphi 0, %s99
      %s117 = sphi 0, %s117
      %s119 = sphi 0, %s117
      %s120 = sphi 0, %s119
      %s134 = sphi 0, %s120
      %s138 = sphi 0, %s138
      %s140 = sphi 0, %s138
      %s141 = sphi 0, %s140
      %s155 = sphi 0, %s141
      %s161 = sphi 0, %s163
      %s164 = sphi 0, %s161
      %s165 = sphi 0, %s164
      %s181 = sphi 0, %s165
    $region4: #{tpu_custom_call.1} parent=1 // loop_header_branch
      %23 = sbr.rel (%p21) target = $region8
    $region5: #{tpu_custom_call.1} parent=1 // loop_body
      %s25 = ssub.s32 %s20, 1
      %s26 = ssub.s32 %s20, 2
      %s27 = sadd.s32 %s20, 1
      %s28 = ssub.s32 %s20, %s27
      %p29 = scmp.eq.s32.totalorder %s28, 0
      %s31 = sadd.s32 %s30, 1
      %s32 = scalar_select %p29, %s30, %s31
      %p35 = pneg %p29
      %p36 = scmp.eq.s32.totalorder %s20, 1
      %p37 = por %p35, %p36
      %p38 = scmp.ne.s32.totalorder %s30, %s33
      %p39 = scmp.eq.s32.totalorder %s20, 0
      %p40 = por %p38, %p39
      %p41 = scmp.ne.s32.totalorder %s30, %s33
      %p42 = scmp.eq.s32.totalorder %s25, 1
      %p43 = por %p41, %p42
      %p44 = scmp.ne.s32.totalorder %s33, %s34
      %p45 = scmp.eq.s32.totalorder %s25, 0
      %p46 = por %p44, %p45
      %p47 = scmp.ne.s32.totalorder %s33, %s34
      %p48 = scmp.eq.s32.totalorder %s26, 1
      %p49 = por %p47, %p48
      %p51 = scmp.ne.s32.totalorder %s34, %s50
      %p52 = scmp.eq.s32.totalorder %s26, 0
      %p53 = por %p51, %p52
      %s55 = sadd.s32 %s54, 1
      %p58 = scmp.eq.s32.totalorder %s20, 1
      %p59 = scmp.ne.s32.totalorder %s54, %s56
      %p60 = scmp.eq.s32.totalorder %s20, 0
      %p61 = por %p59, %p60
      %p62 = scmp.ne.s32.totalorder %s54, %s56
      %p63 = scmp.eq.s32.totalorder %s25, 1
      %p64 = por %p62, %p63
      %p65 = scmp.ne.s32.totalorder %s56, %s57
      %p66 = scmp.eq.s32.totalorder %s25, 0
      %p67 = por %p65, %p66
      %p68 = scmp.ne.s32.totalorder %s56, %s57
      %p69 = scmp.eq.s32.totalorder %s26, 1
      %p70 = por %p68, %p69
      %p72 = scmp.ne.s32.totalorder %s57, %s71
      %p73 = scmp.eq.s32.totalorder %s26, 0
      %p74 = por %p72, %p73
      %s76 = sadd.s32 %s75, 1
      %p79 = scmp.eq.s32.totalorder %s20, 1
      %p80 = scmp.ne.s32.totalorder %s75, %s77
      %p81 = scmp.eq.s32.totalorder %s20, 0
      %p82 = por %p80, %p81
      %p83 = scmp.ne.s32.totalorder %s75, %s77
      %p84 = scmp.eq.s32.totalorder %s25, 1
      %p85 = por %p83, %p84
      %p86 = scmp.ne.s32.totalorder %s77, %s78
      %p87 = scmp.eq.s32.totalorder %s25, 0
      %p88 = por %p86, %p87
      %p89 = scmp.ne.s32.totalorder %s77, %s78
      %p90 = scmp.eq.s32.totalorder %s26, 1
      %p91 = por %p89, %p90
      %p93 = scmp.ne.s32.totalorder %s78, %s92
      %p94 = scmp.eq.s32.totalorder %s26, 0
      %p95 = por %p93, %p94
      %s97 = sadd.s32 %s96, 1
      %p100 = scmp.eq.s32.totalorder %s20, 1
      %p101 = scmp.ne.s32.totalorder %s96, %s98
      %p102 = scmp.eq.s32.totalorder %s20, 0
      %p103 = por %p101, %p102
      %p104 = scmp.ne.s32.totalorder %s96, %s98
      %p105 = scmp.eq.s32.totalorder %s25, 1
      %p106 = por %p104, %p105
      %p107 = scmp.ne.s32.totalorder %s98, %s99
      %p108 = scmp.eq.s32.totalorder %s25, 0
      %p109 = por %p107, %p108
      %p110 = scmp.ne.s32.totalorder %s98, %s99
      %p111 = scmp.eq.s32.totalorder %s26, 1
      %p112 = por %p110, %p111
      %p114 = scmp.ne.s32.totalorder %s99, %s113
      %p115 = scmp.eq.s32.totalorder %s26, 0
      %p116 = por %p114, %p115
      %s118 = sadd.s32 %s117, 1
      %p121 = scmp.eq.s32.totalorder %s20, 1
      %p122 = scmp.ne.s32.totalorder %s117, %s119
      %p123 = scmp.eq.s32.totalorder %s20, 0
      %p124 = por %p122, %p123
      %p125 = scmp.ne.s32.totalorder %s117, %s119
      %p126 = scmp.eq.s32.totalorder %s25, 1
      %p127 = por %p125, %p126
      %p128 = scmp.ne.s32.totalorder %s119, %s120
      %p129 = scmp.eq.s32.totalorder %s25, 0
      %p130 = por %p128, %p129
      %p131 = scmp.ne.s32.totalorder %s119, %s120
      %p132 = scmp.eq.s32.totalorder %s26, 1
      %p133 = por %p131, %p132
      %p135 = scmp.ne.s32.totalorder %s120, %s134
      %p136 = scmp.eq.s32.totalorder %s26, 0
      %p137 = por %p135, %p136
      %s139 = sadd.s32 %s138, 1
      %p142 = scmp.eq.s32.totalorder %s20, 1
      %p143 = scmp.ne.s32.totalorder %s138, %s140
      %p144 = scmp.eq.s32.totalorder %s20, 0
      %p145 = por %p143, %p144
      %p146 = scmp.ne.s32.totalorder %s138, %s140
      %p147 = scmp.eq.s32.totalorder %s25, 1
      %p148 = por %p146, %p147
      %p149 = scmp.ne.s32.totalorder %s140, %s141
      %p150 = scmp.eq.s32.totalorder %s25, 0
      %p151 = por %p149, %p150
      %p152 = scmp.ne.s32.totalorder %s140, %s141
      %p153 = scmp.eq.s32.totalorder %s26, 1
      %p154 = por %p152, %p153
      %p156 = scmp.ne.s32.totalorder %s141, %s155
      %p157 = scmp.eq.s32.totalorder %s26, 0
      %p158 = por %p156, %p157
      %s159 = ssub.s32 %s20, %s27
      %p160 = scmp.eq.s32.totalorder %s159, 0
      %s162 = sadd.s32 %s161, 1
      %s163 = scalar_select %p160, %s161, %s162
      %p166 = pneg %p160
      %p167 = scmp.eq.s32.totalorder %s20, 1
      %p168 = por %p166, %p167
      %p169 = scmp.ne.s32.totalorder %s161, %s164
      %p170 = scmp.eq.s32.totalorder %s20, 0
      %p171 = por %p169, %p170
      %p172 = scmp.ne.s32.totalorder %s161, %s164
      %p173 = scmp.eq.s32.totalorder %s25, 1
      %p174 = por %p172, %p173
      %p175 = scmp.ne.s32.totalorder %s164, %s165
      %p176 = scmp.eq.s32.totalorder %s25, 0
      %p177 = por %p175, %p176
      %p178 = scmp.ne.s32.totalorder %s164, %s165
      %p179 = scmp.eq.s32.totalorder %s26, 1
      %p180 = por %p178, %p179
      %p182 = scmp.ne.s32.totalorder %s165, %s181
      %p183 = scmp.eq.s32.totalorder %s26, 0
      %p184 = por %p182, %p183
      %p185 = scmp.le.s32.totalorder 1, %s20
      %p186 = scmp.lt.s32.totalorder %s20, 3
      %p187 = pnand %p185, %p186
      %p188 = pneg %p187
      // Predicated region
      $region9: #{tpu_custom_call.1} parent=5 // pred_check
        _
      $region10: #{tpu_custom_call.1} parent=5 // pred_check_branch
        %190 = sbr.rel (%p187) target = $region12
      $region11: #{tpu_custom_call.1} parent=5 // pred_region
        %s191 = ssub.s32 %s20, 1
        // Predicated region
        $region13: #{tpu_custom_call.1} parent=11 // pred_check
          %p192 = pneg %p67
        $region14: #{tpu_custom_call.1} parent=11 // pred_check_branch
          %194 = sbr.rel (%p192) target = $region16
        $region15: #{tpu_custom_call.1} parent=11 // pred_region
          %s196 = ssub.s32 6144, 6144
          %197 = vsyncadd [#allocation6], %s196
          %s198 = sshll.u32 [#allocation5], 4
          %s199 = int_to_ptr.vmem [resolvable:$true] %s198
          %204 = dma.hbm_to_vmem [thread:$0]  %s1, 6144, %s199, [#allocation6], 64, 64, 4
        $region16: #{tpu_custom_call.1} parent=11 // pred_fallthru
          _
        // Predicated region
        $region17: #{tpu_custom_call.1} parent=11 // pred_check
          %p205 = pneg %p88
        $region18: #{tpu_custom_call.1} parent=11 // pred_check_branch
          %207 = sbr.rel (%p205) target = $region20
        $region19: #{tpu_custom_call.1} parent=11 // pred_region
          %s209 = ssub.s32 2048, 2048
          %210 = vsyncadd [#allocation6], %s209
          %s211 = sshll.u32 [#allocation7], 4
          %s212 = int_to_ptr.vmem [resolvable:$true] %s211
          %217 = dma.hbm_to_vmem [thread:$0]  %s2, 2048, %s212, [#allocation6], 128, 128, 8
        $region20: #{tpu_custom_call.1} parent=11 // pred_fallthru
          _
        // Predicated region
        $region21: #{tpu_custom_call.1} parent=11 // pred_check
          %p218 = pneg %p109
        $region22: #{tpu_custom_call.1} parent=11 // pred_check_branch
          %220 = sbr.rel (%p218) target = $region24
        $region23: #{tpu_custom_call.1} parent=11 // pred_region
          _
        $region24: #{tpu_custom_call.1} parent=11 // pred_fallthru
          _
        // Predicated region
        $region25: #{tpu_custom_call.1} parent=11 // pred_check
          %p221 = pneg %p130
        $region26: #{tpu_custom_call.1} parent=11 // pred_check_branch
          %223 = sbr.rel (%p221) target = $region28
        $region27: #{tpu_custom_call.1} parent=11 // pred_region
          %s225 = ssub.s32 4352, 4352
          %226 = vsyncadd [#allocation9], %s225
          %s227 = sshll.u32 [#allocation8], 4
          %s228 = int_to_ptr.vmem [resolvable:$true] %s227
          %233 = dma.hbm_to_vmem [thread:$0]  %s4, 4352, %s228, [#allocation9], 256, 256, 16
        $region28: #{tpu_custom_call.1} parent=11 // pred_fallthru
          _
        // Predicated region
        $region29: #{tpu_custom_call.1} parent=11 // pred_check
          %p234 = pneg %p151
        $region30: #{tpu_custom_call.1} parent=11 // pred_check_branch
          %236 = sbr.rel (%p234) target = $region32
        $region31: #{tpu_custom_call.1} parent=11 // pred_region
          %s238 = ssub.s32 4096, 4096
          %239 = vsyncadd [#allocation9], %s238
          %s240 = sshll.u32 [#allocation10], 4
          %s241 = int_to_ptr.vmem [resolvable:$true] %s240
          %246 = dma.hbm_to_vmem [thread:$0]  %s5, 4096, %s241, [#allocation9], 128, 128, 8
        $region32: #{tpu_custom_call.1} parent=11 // pred_fallthru
          _
      $region12: #{tpu_custom_call.1} parent=5 // pred_fallthru
        _
      %p247 = scmp.lt.s32.totalorder %s20, 2
      // Predicated region
      $region33: #{tpu_custom_call.1} parent=5 // pred_check
        %p248 = pneg %p247
      $region34: #{tpu_custom_call.1} parent=5 // pred_check_branch
        %250 = sbr.rel (%p248) target = $region36
      $region35: #{tpu_custom_call.1} parent=5 // pred_region
        // Predicated region
        $region37: #{tpu_custom_call.1} parent=35 // pred_check
          %p251 = pneg %p40
        $region38: #{tpu_custom_call.1} parent=35 // pred_check_branch
          %253 = sbr.rel (%p251) target = $region40
        $region39: #{tpu_custom_call.1} parent=35 // pred_region
          %s254 = sand.u32 %s30, 1
          %s255 = scalar_lea.sflag [#allocation3], %s254
          %s256 = sand.u32 %s30, 1
          %s257 = smul.addr %s256, 128
          %s258 = scalar_lea.vmem [#allocation2], %s257
          %s259 = smul.u32 16, %s20
          %s261 = ssub.s32 2048, 2048
          %262 = vsyncadd %s255, %s261
          %s263 = smul.addr %s259, 2
          %s264 = smul.addr %s263, 64
          %s265 = scalar_lea.hbm %s0, %s264
          %s266 = sshll.u32 %s258, 4
          %s267 = int_to_ptr.vmem [resolvable:$true] %s266
          %272 = dma.hbm_to_vmem [thread:$0]  %s265, 2048, %s267, %s255, 128, 128, 8
        $region40: #{tpu_custom_call.1} parent=35 // pred_fallthru
          _
      $region36: #{tpu_custom_call.1} parent=5 // pred_fallthru
        _
      %p273 = scmp.le.s32.totalorder 1, %s20
      %p274 = scmp.lt.s32.totalorder %s20, 3
      %p275 = pnand %p273, %p274
      %p276 = pneg %p275
      // Predicated region
      $region41: #{tpu_custom_call.1} parent=5 // pred_check
        _
      $region42: #{tpu_custom_call.1} parent=5 // pred_check_branch
        %278 = sbr.rel (%p275) target = $region44
      $region43: #{tpu_custom_call.1} parent=5 // pred_region
        %s279 = ssub.s32 %s20, 1
        %s280 = sand.u32 %s33, 1
        %s281 = scalar_lea.sflag [#allocation3], %s280
        %s282 = sand.u32 %s33, 1
        %s283 = smul.addr %s282, 128
        %s284 = scalar_lea.vmem [#allocation2], %s283
        // Predicated region
        $region45: #{tpu_custom_call.1} parent=43 // pred_check
          %p285 = pneg %p46
        $region46: #{tpu_custom_call.1} parent=43 // pred_check_branch
          %287 = sbr.rel (%p285) target = $region48
        $region47: #{tpu_custom_call.1} parent=43 // pred_region
          %288 = dma.done %s281, 2048
        $region48: #{tpu_custom_call.1} parent=43 // pred_fallthru
          _
        // Predicated region
        $region49: #{tpu_custom_call.1} parent=43 // pred_check
          %p289 = pneg %p67
        $region50: #{tpu_custom_call.1} parent=43 // pred_check_branch
          %291 = sbr.rel (%p289) target = $region52
        $region51: #{tpu_custom_call.1} parent=43 // pred_region
          %292 = dma.done [#allocation6], 6144
        $region52: #{tpu_custom_call.1} parent=43 // pred_fallthru
          _
        // Predicated region
        $region53: #{tpu_custom_call.1} parent=43 // pred_check
          %p293 = pneg %p88
        $region54: #{tpu_custom_call.1} parent=43 // pred_check_branch
          %295 = sbr.rel (%p293) target = $region56
        $region55: #{tpu_custom_call.1} parent=43 // pred_region
          %296 = dma.done [#allocation6], 2048
        $region56: #{tpu_custom_call.1} parent=43 // pred_fallthru
          _
        // Predicated region
        $region57: #{tpu_custom_call.1} parent=43 // pred_check
          %p297 = pneg %p130
        $region58: #{tpu_custom_call.1} parent=43 // pred_check_branch
          %299 = sbr.rel (%p297) target = $region60
        $region59: #{tpu_custom_call.1} parent=43 // pred_region
          %300 = dma.done [#allocation9], 4352
        $region60: #{tpu_custom_call.1} parent=43 // pred_fallthru
          _
        // Predicated region
        $region61: #{tpu_custom_call.1} parent=43 // pred_check
          %p301 = pneg %p151
        $region62: #{tpu_custom_call.1} parent=43 // pred_check_branch
          %303 = sbr.rel (%p301) target = $region64
        $region63: #{tpu_custom_call.1} parent=43 // pred_region
          %304 = dma.done [#allocation9], 4096
        $region64: #{tpu_custom_call.1} parent=43 // pred_fallthru
          _
        %s305 = sand.u32 %s33, 1
        %s306 = scalar_lea.sflag [#allocation3], %s305
        %s307 = sand.u32 %s33, 1
        %s308 = smul.addr %s307, 128
        %s309 = scalar_lea.vmem [#allocation2], %s308
        %p310 = pneg %p46
        %p311 = pneg %p43
        %p312 = pneg %p67
        %p313 = pneg %p64
        %p314 = pneg %p88
        %p315 = pneg %p85
        %p316 = pneg %p109
        %p317 = pneg %p106
        %p318 = pneg %p130
        %p319 = pneg %p127
        %p320 = pneg %p151
        %p321 = pneg %p148
        %p322 = pneg %p177
        %p323 = pneg %p174
        %s324 = sand.u32 %s164, 1
        %s325 = scalar_lea.sflag [#allocation4], %s324
        %s326 = sand.u32 %s164, 1
        %s327 = smul.addr %s326, 256
        %s328 = scalar_lea.vmem [#allocation11], %s327
        %s329 = smul.u32 16, %s25
        %s330 = smul.u32 16, %s25
        %v332 = vld [vmem:[%s284] sm:$0xff]
        %v333 = vld [vmem:[%s284 + $0x8] sm:$0xff]
        %v334 = vld [vmem:[%s284 + $0x10] sm:$0xff]
        %v335 = vld [vmem:[%s284 + $0x18] sm:$0xff]
        %v336 = vld [vmem:[%s284 + $0x20] sm:$0xff]
        %v337 = vld [vmem:[%s284 + $0x28] sm:$0xff]
        %v338 = vld [vmem:[%s284 + $0x30] sm:$0xff]
        %v339 = vld [vmem:[%s284 + $0x38] sm:$0xff]
        %v340 = vld [vmem:[%s284 + $0x40] sm:$0xff]
        %v341 = vld [vmem:[%s284 + $0x48] sm:$0xff]
        %v342 = vld [vmem:[%s284 + $0x50] sm:$0xff]
        %v343 = vld [vmem:[%s284 + $0x58] sm:$0xff]
        %v344 = vld [vmem:[%s284 + $0x60] sm:$0xff]
        %v345 = vld [vmem:[%s284 + $0x68] sm:$0xff]
        %v346 = vld [vmem:[%s284 + $0x70] sm:$0xff]
        %v347 = vld [vmem:[%s284 + $0x78] sm:$0xff]
        %v348 = vld [vmem:[#allocation5] sm:$0xf]
        %v349 = vld [vmem:[#allocation5 + $0x4] sm:$0xf]
        %v350 = vld [vmem:[#allocation5 + $0x8] sm:$0xf]
        %v351 = vld [vmem:[#allocation5 + $0xc] sm:$0xf]
        %v352 = vld [vmem:[#allocation5 + $0x10] sm:$0xf]
        %v353 = vld [vmem:[#allocation5 + $0x14] sm:$0xf]
        %v354 = vld [vmem:[#allocation5 + $0x18] sm:$0xf]
        %v355 = vld [vmem:[#allocation5 + $0x1c] sm:$0xf]
        %v356 = vld [vmem:[#allocation5 + $0x20] sm:$0xf]
        %v357 = vld [vmem:[#allocation5 + $0x24] sm:$0xf]
        %v358 = vld [vmem:[#allocation5 + $0x28] sm:$0xf]
        %v359 = vld [vmem:[#allocation5 + $0x2c] sm:$0xf]
        %v360 = vld [vmem:[#allocation5 + $0x30] sm:$0xf]
        %v361 = vld [vmem:[#allocation5 + $0x34] sm:$0xf]
        %v362 = vld [vmem:[#allocation5 + $0x38] sm:$0xf]
        %v363 = vld [vmem:[#allocation5 + $0x3c] sm:$0xf]
        %v364 = vld [vmem:[#allocation5 + $0x40] sm:$0xf]
        %v365 = vld [vmem:[#allocation5 + $0x44] sm:$0xf]
        %v366 = vld [vmem:[#allocation5 + $0x48] sm:$0xf]
        %v367 = vld [vmem:[#allocation5 + $0x4c] sm:$0xf]
        %v368 = vld [vmem:[#allocation5 + $0x50] sm:$0xf]
        %v369 = vld [vmem:[#allocation5 + $0x54] sm:$0xf]
        %v370 = vld [vmem:[#allocation5 + $0x58] sm:$0xf]
        %v371 = vld [vmem:[#allocation5 + $0x5c] sm:$0xf]
        %v372 = vld [vmem:[#allocation5 + $0x60] sm:$0xf]
        %v373 = vld [vmem:[#allocation5 + $0x64] sm:$0xf]
        %v374 = vld [vmem:[#allocation5 + $0x68] sm:$0xf]
        %v375 = vld [vmem:[#allocation5 + $0x6c] sm:$0xf]
        %v376 = vld [vmem:[#allocation5 + $0x70] sm:$0xf]
        %v377 = vld [vmem:[#allocation5 + $0x74] sm:$0xf]
        %v378 = vld [vmem:[#allocation5 + $0x78] sm:$0xf]
        %v379 = vld [vmem:[#allocation5 + $0x7c] sm:$0xf]
        %v380 = vld [vmem:[%s3] sm:$0x1]
        %v381 = vlaneseq
        %v382 = vshrl.u32 %v381, 7
        %v383 = vsub.s32 0, %v382
        %v384 = vrot.slane %v380, %v383
        %v401 = vunpack.c.l.b16 %v332
        %v402 = vunpack.c.h.b16 %v332
        %v403 = vunpack.c.l.b16 %v333
        %v404 = vunpack.c.h.b16 %v333
        %v405 = vunpack.c.l.b16 %v334
        %v406 = vunpack.c.h.b16 %v334
        %v407 = vunpack.c.l.b16 %v335
        %v408 = vunpack.c.h.b16 %v335
        %v409 = vunpack.c.l.b16 %v336
        %v410 = vunpack.c.h.b16 %v336
        %v411 = vunpack.c.l.b16 %v337
        %v412 = vunpack.c.h.b16 %v337
        %v413 = vunpack.c.l.b16 %v338
        %v414 = vunpack.c.h.b16 %v338
        %v415 = vunpack.c.l.b16 %v339
        %v416 = vunpack.c.h.b16 %v339
        %v417 = vunpack.c.l.b16 %v340
        %v418 = vunpack.c.h.b16 %v340
        %v419 = vunpack.c.l.b16 %v341
        %v420 = vunpack.c.h.b16 %v341
        %v421 = vunpack.c.l.b16 %v342
        %v422 = vunpack.c.h.b16 %v342
        %v423 = vunpack.c.l.b16 %v343
        %v424 = vunpack.c.h.b16 %v343
        %v425 = vunpack.c.l.b16 %v344
        %v426 = vunpack.c.h.b16 %v344
        %v427 = vunpack.c.l.b16 %v345
        %v428 = vunpack.c.h.b16 %v345
        %v429 = vunpack.c.l.b16 %v346
        %v430 = vunpack.c.h.b16 %v346
        %v431 = vunpack.c.l.b16 %v347
        %v432 = vunpack.c.h.b16 %v347
        %v433 = vpack.c.b16 %v403, %v401
        %v434 = vpack.c.b16 %v404, %v402
        %v435 = vpack.c.b16 %v407, %v405
        %v436 = vpack.c.b16 %v408, %v406
        %v437 = vpack.c.b16 %v411, %v409
        %v438 = vpack.c.b16 %v412, %v410
        %v439 = vpack.c.b16 %v415, %v413
        %v440 = vpack.c.b16 %v416, %v414
        %v441 = vpack.c.b16 %v419, %v417
        %v442 = vpack.c.b16 %v420, %v418
        %v443 = vpack.c.b16 %v423, %v421
        %v444 = vpack.c.b16 %v424, %v422
        %v445 = vpack.c.b16 %v427, %v425
        %v446 = vpack.c.b16 %v428, %v426
        %v447 = vpack.c.b16 %v431, %v429
        %v448 = vpack.c.b16 %v432, %v430
        %v497 = vunpack.c.l.b16 %v348
        %v498 = vunpack.c.l.b16 %v349
        %v499 = vunpack.c.l.b16 %v350
        %v500 = vunpack.c.l.b16 %v351
        %v501 = vunpack.c.l.b16 %v352
        %v502 = vunpack.c.l.b16 %v353
        %v503 = vunpack.c.l.b16 %v354
        %v504 = vunpack.c.l.b16 %v355
        %v505 = vunpack.c.l.b16 %v356
        %v506 = vunpack.c.l.b16 %v357
        %v507 = vunpack.c.l.b16 %v358
        %v508 = vunpack.c.l.b16 %v359
        %v509 = vunpack.c.l.b16 %v360
        %v510 = vunpack.c.l.b16 %v361
        %v511 = vunpack.c.l.b16 %v362
        %v512 = vunpack.c.l.b16 %v363
        %v513 = vunpack.c.l.b16 %v364
        %v514 = vunpack.c.l.b16 %v365
        %v515 = vunpack.c.l.b16 %v366
        %v516 = vunpack.c.l.b16 %v367
        %v517 = vunpack.c.l.b16 %v368
        %v518 = vunpack.c.l.b16 %v369
        %v519 = vunpack.c.l.b16 %v370
        %v520 = vunpack.c.l.b16 %v371
        %v521 = vunpack.c.l.b16 %v372
        %v522 = vunpack.c.l.b16 %v373
        %v523 = vunpack.c.l.b16 %v374
        %v524 = vunpack.c.l.b16 %v375
        %v525 = vunpack.c.l.b16 %v376
        %v526 = vunpack.c.l.b16 %v377
        %v527 = vunpack.c.l.b16 %v378
        %v528 = vunpack.c.l.b16 %v379
        %v529 = vpack.c.b16 %v498, %v497
        %v530 = vpack.c.b16 %v500, %v499
        %v531 = vpack.c.b16 %v502, %v501
        %v532 = vpack.c.b16 %v504, %v503
        %v533 = vpack.c.b16 %v506, %v505
        %v534 = vpack.c.b16 %v508, %v507
        %v535 = vpack.c.b16 %v510, %v509
        %v536 = vpack.c.b16 %v512, %v511
        %v537 = vpack.c.b16 %v514, %v513
        %v538 = vpack.c.b16 %v516, %v515
        %v539 = vpack.c.b16 %v518, %v517
        %v540 = vpack.c.b16 %v520, %v519
        %v541 = vpack.c.b16 %v522, %v521
        %v542 = vpack.c.b16 %v524, %v523
        %v543 = vpack.c.b16 %v526, %v525
        %v544 = vpack.c.b16 %v528, %v527
        %561 = vmatprep.subr.bf16.mxu0 0
        %562 = vmatpush1.bf16.msra.mxu0 %v529
        %563 = vmatprep.subr.bf16.mxu0 0
        %564 = vmatpush1.bf16.msra.mxu0 %v530
        %565 = vmatprep.subr.bf16.mxu0 0
        %566 = vmatpush1.bf16.msra.mxu0 %v531
        %567 = vmatprep.subr.bf16.mxu0 0
        %568 = vmatpush1.bf16.msra.mxu0 %v532
        %569 = vmatprep.subr.bf16.mxu0 0
        %570 = vmatpush1.bf16.msra.mxu0 %v533
        %571 = vmatprep.subr.bf16.mxu0 0
        %572 = vmatpush1.bf16.msra.mxu0 %v534
        %573 = vmatprep.subr.bf16.mxu0 0
        %574 = vmatpush1.bf16.msra.mxu0 %v535
        %575 = vmatprep.subr.bf16.mxu0 0
        %576 = vmatpush1.bf16.msra.mxu0 %v536
        %577 = vmatprep.subr.bf16.mxu0 0
        %578 = vmatpush1.bf16.msra.mxu0 %v537
        %579 = vmatprep.subr.bf16.mxu0 0
        %580 = vmatpush1.bf16.msra.mxu0 %v538
        %581 = vmatprep.subr.bf16.mxu0 0
        %582 = vmatpush1.bf16.msra.mxu0 %v539
        %583 = vmatprep.subr.bf16.mxu0 0
        %584 = vmatpush1.bf16.msra.mxu0 %v540
        %585 = vmatprep.subr.bf16.mxu0 0
        %586 = vmatpush1.bf16.msra.mxu0 %v541
        %587 = vmatprep.subr.bf16.mxu0 0
        %588 = vmatpush1.bf16.msra.mxu0 %v542
        %589 = vmatprep.subr.bf16.mxu0 0
        %590 = vmatpush1.bf16.msra.mxu0 %v543
        %591 = vmatprep.subr.bf16.mxu0 0
        %592 = vmatpush1.bf16.msra.mxu0 %v544
        %593 = vmatprep.mubr.bf16.mxu0 %v434
        %594 = vmatmul.mubr.bf16.gmra.mrb[0].mxu0 %v433
        %v595 = vpop.f32.mrb[0].mxu0
        %v596 = vadd.f32 %v384, %v595
        %v597 = vpop.f32.mrb[0].mxu0
        %v598 = vpop.f32.mrb[0].mxu0
        %v599 = vadd.f32 %v384, %v598
        %v600 = vpop.f32.mrb[0].mxu0
        %601 = vmatprep.mubr.bf16.mxu0 %v436
        %602 = vmatmul.mubr.bf16.gmra.mrb[0].mxu0 %v435
        %v603 = vpop.f32.mrb[0].mxu0
        %v604 = vadd.f32 %v384, %v603
        %v605 = vpop.f32.mrb[0].mxu0
        %v606 = vpop.f32.mrb[0].mxu0
        %v607 = vadd.f32 %v384, %v606
        %v608 = vpop.f32.mrb[0].mxu0
        %609 = vmatprep.mubr.bf16.mxu0 %v438
        %610 = vmatmul.mubr.bf16.gmra.mrb[0].mxu0 %v437
        %v611 = vpop.f32.mrb[0].mxu0
        %v612 = vadd.f32 %v384, %v611
        %v613 = vpop.f32.mrb[0].mxu0
        %v614 = vpop.f32.mrb[0].mxu0
        %v615 = vadd.f32 %v384, %v614
        %v616 = vpop.f32.mrb[0].mxu0
        %617 = vmatprep.mubr.bf16.mxu0 %v440
        %618 = vmatmul.mubr.bf16.gmra.mrb[0].mxu0 %v439
        %v619 = vpop.f32.mrb[0].mxu0
        %v620 = vadd.f32 %v384, %v619
        %v621 = vpop.f32.mrb[0].mxu0
        %v622 = vpop.f32.mrb[0].mxu0
        %v623 = vadd.f32 %v384, %v622
        %v624 = vpop.f32.mrb[0].mxu0
        %625 = vmatprep.mubr.bf16.mxu0 %v442
        %626 = vmatmul.mubr.bf16.gmra.mrb[0].mxu0 %v441
        %v627 = vpop.f32.mrb[0].mxu0
        %v628 = vadd.f32 %v384, %v627
        %v629 = vpop.f32.mrb[0].mxu0
        %v630 = vpop.f32.mrb[0].mxu0
        %v631 = vadd.f32 %v384, %v630
        %v632 = vpop.f32.mrb[0].mxu0
        %633 = vmatprep.mubr.bf16.mxu0 %v444
        %634 = vmatmul.mubr.bf16.gmra.mrb[0].mxu0 %v443
        %v635 = vpop.f32.mrb[0].mxu0
        %v636 = vadd.f32 %v384, %v635
        %v637 = vpop.f32.mrb[0].mxu0
        %v638 = vpop.f32.mrb[0].mxu0
        %v639 = vadd.f32 %v384, %v638
        %v640 = vpop.f32.mrb[0].mxu0
        %641 = vmatprep.mubr.bf16.mxu0 %v446
        %642 = vmatmul.mubr.bf16.gmra.mrb[0].mxu0 %v445
        %v643 = vpop.f32.mrb[0].mxu0
        %v644 = vadd.f32 %v384, %v643
        %v645 = vpop.f32.mrb[0].mxu0
        %v646 = vpop.f32.mrb[0].mxu0
        %v647 = vadd.f32 %v384, %v646
        %v648 = vpop.f32.mrb[0].mxu0
        %649 = vmatprep.mubr.bf16.mxu0 %v448
        %650 = vmatmul.mubr.bf16.gmra.mrb[0].mxu0 %v447
        %v651 = vpop.f32.mrb[0].mxu0
        %v652 = vadd.f32 %v384, %v651
        %v653 = vpop.f32.mrb[0].mxu0
        %v654 = vpop.f32.mrb[0].mxu0
        %v655 = vadd.f32 %v384, %v654
        %v656 = vpop.f32.mrb[0].mxu0
        %657 = vdwg.mxu0
        %v658 = vtanh.pop %v596
        %v659 = vtanh.pop %v599
        %v660 = vtanh.pop %v604
        %v661 = vtanh.pop %v607
        %v662 = vtanh.pop %v612
        %v663 = vtanh.pop %v615
        %v664 = vtanh.pop %v620
        %v665 = vtanh.pop %v623
        %v666 = vtanh.pop %v628
        %v667 = vtanh.pop %v631
        %v668 = vtanh.pop %v636
        %v669 = vtanh.pop %v639
        %v670 = vtanh.pop %v644
        %v671 = vtanh.pop %v647
        %v672 = vtanh.pop %v652
        %v673 = vtanh.pop %v655
        %v674 = vpack.c.bf16 %v659, %v658
        %v675 = vpack.c.bf16 %v661, %v660
        %v676 = vpack.c.bf16 %v663, %v662
        %v677 = vpack.c.bf16 %v665, %v664
        %v678 = vpack.c.bf16 %v667, %v666
        %v679 = vpack.c.bf16 %v669, %v668
        %v680 = vpack.c.bf16 %v671, %v670
        %v681 = vpack.c.bf16 %v673, %v672
        %v682 = vld [vmem:[#allocation5 + $0x80] sm:$0xf]
        %v683 = vld [vmem:[#allocation5 + $0x84] sm:$0xf]
        %v684 = vld [vmem:[#allocation5 + $0x88] sm:$0xf]
        %v685 = vld [vmem:[#allocation5 + $0x8c] sm:$0xf]
        %v686 = vld [vmem:[#allocation5 + $0x90] sm:$0xf]
        %v687 = vld [vmem:[#allocation5 + $0x94] sm:$0xf]
        %v688 = vld [vmem:[#allocation5 + $0x98] sm:$0xf]
        %v689 = vld [vmem:[#allocation5 + $0x9c] sm:$0xf]
        %v690 = vld [vmem:[#allocation5 + $0xa0] sm:$0xf]
        %v691 = vld [vmem:[#allocation5 + $0xa4] sm:$0xf]
        %v692 = vld [vmem:[#allocation5 + $0xa8] sm:$0xf]
        %v693 = vld [vmem:[#allocation5 + $0xac] sm:$0xf]
        %v694 = vld [vmem:[#allocation5 + $0xb0] sm:$0xf]
        %v695 = vld [vmem:[#allocation5 + $0xb4] sm:$0xf]
        %v696 = vld [vmem:[#allocation5 + $0xb8] sm:$0xf]
        %v697 = vld [vmem:[#allocation5 + $0xbc] sm:$0xf]
        %v698 = vld [vmem:[%s3 + $0x1] sm:$0x1]
        %v699 = vlaneseq
        %v700 = vshrl.u32 %v699, 7
        %v701 = vsub.s32 0, %v700
        %v702 = vrot.slane %v698, %v701
        %v719 = vunpack.c.l.b16 %v682
        %v720 = vunpack.c.l.b16 %v683
        %v721 = vunpack.c.l.b16 %v684
        %v722 = vunpack.c.l.b16 %v685
        %v723 = vunpack.c.l.b16 %v686
        %v724 = vunpack.c.l.b16 %v687
        %v725 = vunpack.c.l.b16 %v688
        %v726 = vunpack.c.l.b16 %v689
        %v727 = vunpack.c.l.b16 %v690
        %v728 = vunpack.c.l.b16 %v691
        %v729 = vunpack.c.l.b16 %v692
        %v730 = vunpack.c.l.b16 %v693
        %v731 = vunpack.c.l.b16 %v694
        %v732 = vunpack.c.l.b16 %v695
        %v733 = vunpack.c.l.b16 %v696
        %v734 = vunpack.c.l.b16 %v697
        %v735 = vpack.c.b16 %v720, %v719
        %v736 = vpack.c.b16 %v722, %v721
        %v737 = vpack.c.b16 %v724, %v723
        %v738 = vpack.c.b16 %v726, %v725
        %v739 = vpack.c.b16 %v728, %v727
        %v740 = vpack.c.b16 %v730, %v729
        %v741 = vpack.c.b16 %v732, %v731
        %v742 = vpack.c.b16 %v734, %v733
        %751 = vmatprep.subr.bf16.mxu0 0
        %752 = vmatpush1.bf16.msra.mxu0 %v735
        %753 = vmatprep.subr.bf16.mxu0 0
        %754 = vmatpush1.bf16.msra.mxu0 %v736
        %755 = vmatprep.subr.bf16.mxu0 0
        %756 = vmatpush1.bf16.msra.mxu0 %v737
        %757 = vmatprep.subr.bf16.mxu0 0
        %758 = vmatpush1.bf16.msra.mxu0 %v738
        %759 = vmatprep.subr.bf16.mxu0 0
        %760 = vmatpush1.bf16.msra.mxu0 %v739
        %761 = vmatprep.subr.bf16.mxu0 0
        %762 = vmatpush1.bf16.msra.mxu0 %v740
        %763 = vmatprep.subr.bf16.mxu0 0
        %764 = vmatpush1.bf16.msra.mxu0 %v741
        %765 = vmatprep.subr.bf16.mxu0 0
        %766 = vmatpush1.bf16.msra.mxu0 %v742
        %767 = vmatprep.subr.bf16.mxu0 0
        %768 = vmatpush1.bf16.msra.mxu0 0
        %769 = vmatprep.subr.bf16.mxu0 0
        %770 = vmatpush1.bf16.msra.mxu0 0
        %771 = vmatprep.subr.bf16.mxu0 0
        %772 = vmatpush1.bf16.msra.mxu0 0
        %773 = vmatprep.subr.bf16.mxu0 0
        %774 = vmatpush1.bf16.msra.mxu0 0
        %775 = vmatprep.subr.bf16.mxu0 0
        %776 = vmatpush1.bf16.msra.mxu0 0
        %777 = vmatprep.subr.bf16.mxu0 0
        %778 = vmatpush1.bf16.msra.mxu0 0
        %779 = vmatprep.subr.bf16.mxu0 0
        %780 = vmatpush1.bf16.msra.mxu0 0
        %781 = vmatprep.subr.bf16.mxu0 0
        %782 = vmatpush1.bf16.msra.mxu0 0
        %783 = vmatprep.mubr.bf16.mxu0 0
        %784 = vmatmul.mubr.bf16.gmra.mrb[0].mxu0 %v674
        %v785 = vpop.f32.mrb[0].mxu0
        %v786 = vadd.f32 %v702, %v785
        %v787 = vpop.f32.mrb[0].mxu0
        %v788 = vpop.f32.mrb[0].mxu0
        %v789 = vadd.f32 %v702, %v788
        %v790 = vpop.f32.mrb[0].mxu0
        %791 = vmatprep.mubr.bf16.mxu0 0
        %792 = vmatmul.mubr.bf16.gmra.mrb[0].mxu0 %v675
        %v793 = vpop.f32.mrb[0].mxu0
        %v794 = vadd.f32 %v702, %v793
        %v795 = vpop.f32.mrb[0].mxu0
        %v796 = vpop.f32.mrb[0].mxu0
        %v797 = vadd.f32 %v702, %v796
        %v798 = vpop.f32.mrb[0].mxu0
        %799 = vmatprep.mubr.bf16.mxu0 0
        %800 = vmatmul.mubr.bf16.gmra.mrb[0].mxu0 %v676
        %v801 = vpop.f32.mrb[0].mxu0
        %v802 = vadd.f32 %v702, %v801
        %v803 = vpop.f32.mrb[0].mxu0
        %v804 = vpop.f32.mrb[0].mxu0
        %v805 = vadd.f32 %v702, %v804
        %v806 = vpop.f32.mrb[0].mxu0
        %807 = vmatprep.mubr.bf16.mxu0 0
        %808 = vmatmul.mubr.bf16.gmra.mrb[0].mxu0 %v677
        %v809 = vpop.f32.mrb[0].mxu0
        %v810 = vadd.f32 %v702, %v809
        %v811 = vpop.f32.mrb[0].mxu0
        %v812 = vpop.f32.mrb[0].mxu0
        %v813 = vadd.f32 %v702, %v812
        %v814 = vpop.f32.mrb[0].mxu0
        %815 = vmatprep.mubr.bf16.mxu0 0
        %816 = vmatmul.mubr.bf16.gmra.mrb[0].mxu0 %v678
        %v817 = vpop.f32.mrb[0].mxu0
        %v818 = vadd.f32 %v702, %v817
        %v819 = vpop.f32.mrb[0].mxu0
        %v820 = vpop.f32.mrb[0].mxu0
        %v821 = vadd.f32 %v702, %v820
        %v822 = vpop.f32.mrb[0].mxu0
        %823 = vmatprep.mubr.bf16.mxu0 0
        %824 = vmatmul.mubr.bf16.gmra.mrb[0].mxu0 %v679
        %v825 = vpop.f32.mrb[0].mxu0
        %v826 = vadd.f32 %v702, %v825
        %v827 = vpop.f32.mrb[0].mxu0
        %v828 = vpop.f32.mrb[0].mxu0
        %v829 = vadd.f32 %v702, %v828
        %v830 = vpop.f32.mrb[0].mxu0
        %831 = vmatprep.mubr.bf16.mxu0 0
        %832 = vmatmul.mubr.bf16.gmra.mrb[0].mxu0 %v680
        %v833 = vpop.f32.mrb[0].mxu0
        %v834 = vadd.f32 %v702, %v833
        %v835 = vpop.f32.mrb[0].mxu0
        %v836 = vpop.f32.mrb[0].mxu0
        %v837 = vadd.f32 %v702, %v836
        %v838 = vpop.f32.mrb[0].mxu0
        %839 = vmatprep.mubr.bf16.mxu0 0
        %840 = vmatmul.mubr.bf16.gmra.mrb[0].mxu0 %v681
        %v841 = vpop.f32.mrb[0].mxu0
        %v842 = vadd.f32 %v702, %v841
        %v843 = vpop.f32.mrb[0].mxu0
        %v844 = vpop.f32.mrb[0].mxu0
        %v845 = vadd.f32 %v702, %v844
        %v846 = vpop.f32.mrb[0].mxu0
        %847 = vdwg.mxu0
        %v848 = vtanh.pop %v786
        %v849 = vtanh.pop %v789
        %v850 = vtanh.pop %v794
        %v851 = vtanh.pop %v797
        %v852 = vtanh.pop %v802
        %v853 = vtanh.pop %v805
        %v854 = vtanh.pop %v810
        %v855 = vtanh.pop %v813
        %v856 = vtanh.pop %v818
        %v857 = vtanh.pop %v821
        %v858 = vtanh.pop %v826
        %v859 = vtanh.pop %v829
        %v860 = vtanh.pop %v834
        %v861 = vtanh.pop %v837
        %v862 = vtanh.pop %v842
        %v863 = vtanh.pop %v845
        %v864 = vpack.c.bf16 %v849, %v848
        %v865 = vpack.c.bf16 %v851, %v850
        %v866 = vpack.c.bf16 %v853, %v852
        %v867 = vpack.c.bf16 %v855, %v854
        %v868 = vpack.c.bf16 %v857, %v856
        %v869 = vpack.c.bf16 %v859, %v858
        %v870 = vpack.c.bf16 %v861, %v860
        %v871 = vpack.c.bf16 %v863, %v862
        %v872 = vld [vmem:[#allocation5 + $0xc0] sm:$0xf]
        %v873 = vld [vmem:[#allocation5 + $0xc4] sm:$0xf]
        %v874 = vld [vmem:[#allocation5 + $0xc8] sm:$0xf]
        %v875 = vld [vmem:[#allocation5 + $0xcc] sm:$0xf]
        %v876 = vld [vmem:[#allocation5 + $0xd0] sm:$0xf]
        %v877 = vld [vmem:[#allocation5 + $0xd4] sm:$0xf]
        %v878 = vld [vmem:[#allocation5 + $0xd8] sm:$0xf]
        %v879 = vld [vmem:[#allocation5 + $0xdc] sm:$0xf]
        %v880 = vld [vmem:[#allocation5 + $0xe0] sm:$0xf]
        %v881 = vld [vmem:[#allocation5 + $0xe4] sm:$0xf]
        %v882 = vld [vmem:[#allocation5 + $0xe8] sm:$0xf]
        %v883 = vld [vmem:[#allocation5 + $0xec] sm:$0xf]
        %v884 = vld [vmem:[#allocation5 + $0xf0] sm:$0xf]
        %v885 = vld [vmem:[#allocation5 + $0xf4] sm:$0xf]
        %v886 = vld [vmem:[#allocation5 + $0xf8] sm:$0xf]
        %v887 = vld [vmem:[#allocation5 + $0xfc] sm:$0xf]
        %v888 = vld [vmem:[%s3 + $0x2] sm:$0x1]
        %v889 = vlaneseq
        %v890 = vshrl.u32 %v889, 7
        %v891 = vsub.s32 0, %v890
        %v892 = vrot.slane %v888, %v891
        %v909 = vunpack.c.l.b16 %v872
        %v910 = vunpack.c.l.b16 %v873
        %v911 = vunpack.c.l.b16 %v874
        %v912 = vunpack.c.l.b16 %v875
        %v913 = vunpack.c.l.b16 %v876
        %v914 = vunpack.c.l.b16 %v877
        %v915 = vunpack.c.l.b16 %v878
        %v916 = vunpack.c.l.b16 %v879
        %v917 = vunpack.c.l.b16 %v880
        %v918 = vunpack.c.l.b16 %v881
        %v919 = vunpack.c.l.b16 %v882
        %v920 = vunpack.c.l.b16 %v883
        %v921 = vunpack.c.l.b16 %v884
        %v922 = vunpack.c.l.b16 %v885
        %v923 = vunpack.c.l.b16 %v886
        %v924 = vunpack.c.l.b16 %v887
        %v925 = vpack.c.b16 %v910, %v909
        %v926 = vpack.c.b16 %v912, %v911
        %v927 = vpack.c.b16 %v914, %v913
        %v928 = vpack.c.b16 %v916, %v915
        %v929 = vpack.c.b16 %v918, %v917
        %v930 = vpack.c.b16 %v920, %v919
        %v931 = vpack.c.b16 %v922, %v921
        %v932 = vpack.c.b16 %v924, %v923
        %941 = vmatprep.subr.bf16.mxu0 0
        %942 = vmatpush1.bf16.msra.mxu0 %v925
        %943 = vmatprep.subr.bf16.mxu0 0
        %944 = vmatpush1.bf16.msra.mxu0 %v926
        %945 = vmatprep.subr.bf16.mxu0 0
        %946 = vmatpush1.bf16.msra.mxu0 %v927
        %947 = vmatprep.subr.bf16.mxu0 0
        %948 = vmatpush1.bf16.msra.mxu0 %v928
        %949 = vmatprep.subr.bf16.mxu0 0
        %950 = vmatpush1.bf16.msra.mxu0 %v929
        %951 = vmatprep.subr.bf16.mxu0 0
        %952 = vmatpush1.bf16.msra.mxu0 %v930
        %953 = vmatprep.subr.bf16.mxu0 0
        %954 = vmatpush1.bf16.msra.mxu0 %v931
        %955 = vmatprep.subr.bf16.mxu0 0
        %956 = vmatpush1.bf16.msra.mxu0 %v932
        %957 = vmatprep.subr.bf16.mxu0 0
        %958 = vmatpush1.bf16.msra.mxu0 0
        %959 = vmatprep.subr.bf16.mxu0 0
        %960 = vmatpush1.bf16.msra.mxu0 0
        %961 = vmatprep.subr.bf16.mxu0 0
        %962 = vmatpush1.bf16.msra.mxu0 0
        %963 = vmatprep.subr.bf16.mxu0 0
        %964 = vmatpush1.bf16.msra.mxu0 0
        %965 = vmatprep.subr.bf16.mxu0 0
        %966 = vmatpush1.bf16.msra.mxu0 0
        %967 = vmatprep.subr.bf16.mxu0 0
        %968 = vmatpush1.bf16.msra.mxu0 0
        %969 = vmatprep.subr.bf16.mxu0 0
        %970 = vmatpush1.bf16.msra.mxu0 0
        %971 = vmatprep.subr.bf16.mxu0 0
        %972 = vmatpush1.bf16.msra.mxu0 0
        %973 = vmatprep.mubr.bf16.mxu0 0
        %974 = vmatmul.mubr.bf16.gmra.mrb[0].mxu0 %v864
        %v975 = vpop.f32.mrb[0].mxu0
        %v976 = vadd.f32 %v892, %v975
        %v977 = vpop.f32.mrb[0].mxu0
        %v978 = vpop.f32.mrb[0].mxu0
        %v979 = vadd.f32 %v892, %v978
        %v980 = vpop.f32.mrb[0].mxu0
        %981 = vmatprep.mubr.bf16.mxu0 0
        %982 = vmatmul.mubr.bf16.gmra.mrb[0].mxu0 %v865
        %v983 = vpop.f32.mrb[0].mxu0
        %v984 = vadd.f32 %v892, %v983
        %v985 = vpop.f32.mrb[0].mxu0
        %v986 = vpop.f32.mrb[0].mxu0
        %v987 = vadd.f32 %v892, %v986
        %v988 = vpop.f32.mrb[0].mxu0
        %989 = vmatprep.mubr.bf16.mxu0 0
        %990 = vmatmul.mubr.bf16.gmra.mrb[0].mxu0 %v866
        %v991 = vpop.f32.mrb[0].mxu0
        %v992 = vadd.f32 %v892, %v991
        %v993 = vpop.f32.mrb[0].mxu0
        %v994 = vpop.f32.mrb[0].mxu0
        %v995 = vadd.f32 %v892, %v994
        %v996 = vpop.f32.mrb[0].mxu0
        %997 = vmatprep.mubr.bf16.mxu0 0
        %998 = vmatmul.mubr.bf16.gmra.mrb[0].mxu0 %v867
        %v999 = vpop.f32.mrb[0].mxu0
        %v1000 = vadd.f32 %v892, %v999
        %v1001 = vpop.f32.mrb[0].mxu0
        %v1002 = vpop.f32.mrb[0].mxu0
        %v1003 = vadd.f32 %v892, %v1002
        %v1004 = vpop.f32.mrb[0].mxu0
        %1005 = vmatprep.mubr.bf16.mxu0 0
        %1006 = vmatmul.mubr.bf16.gmra.mrb[0].mxu0 %v868
        %v1007 = vpop.f32.mrb[0].mxu0
        %v1008 = vadd.f32 %v892, %v1007
        %v1009 = vpop.f32.mrb[0].mxu0
        %v1010 = vpop.f32.mrb[0].mxu0
        %v1011 = vadd.f32 %v892, %v1010
        %v1012 = vpop.f32.mrb[0].mxu0
        %1013 = vmatprep.mubr.bf16.mxu0 0
        %1014 = vmatmul.mubr.bf16.gmra.mrb[0].mxu0 %v869
        %v1015 = vpop.f32.mrb[0].mxu0
        %v1016 = vadd.f32 %v892, %v1015
        %v1017 = vpop.f32.mrb[0].mxu0
        %v1018 = vpop.f32.mrb[0].mxu0
        %v1019 = vadd.f32 %v892, %v1018
        %v1020 = vpop.f32.mrb[0].mxu0
        %1021 = vmatprep.mubr.bf16.mxu0 0
        %1022 = vmatmul.mubr.bf16.gmra.mrb[0].mxu0 %v870
        %v1023 = vpop.f32.mrb[0].mxu0
        %v1024 = vadd.f32 %v892, %v1023
        %v1025 = vpop.f32.mrb[0].mxu0
        %v1026 = vpop.f32.mrb[0].mxu0
        %v1027 = vadd.f32 %v892, %v1026
        %v1028 = vpop.f32.mrb[0].mxu0
        %1029 = vmatprep.mubr.bf16.mxu0 0
        %1030 = vmatmul.mubr.bf16.gmra.mrb[0].mxu0 %v871
        %v1031 = vpop.f32.mrb[0].mxu0
        %v1032 = vadd.f32 %v892, %v1031
        %v1033 = vpop.f32.mrb[0].mxu0
        %v1034 = vpop.f32.mrb[0].mxu0
        %v1035 = vadd.f32 %v892, %v1034
        %v1036 = vpop.f32.mrb[0].mxu0
        %1037 = vdwg.mxu0
        %v1038 = vld [vmem:[#allocation5 + $0x100] sm:$0xf]
        %v1039 = vld [vmem:[#allocation5 + $0x104] sm:$0xf]
        %v1040 = vld [vmem:[#allocation5 + $0x108] sm:$0xf]
        %v1041 = vld [vmem:[#allocation5 + $0x10c] sm:$0xf]
        %v1042 = vld [vmem:[#allocation5 + $0x110] sm:$0xf]
        %v1043 = vld [vmem:[#allocation5 + $0x114] sm:$0xf]
        %v1044 = vld [vmem:[#allocation5 + $0x118] sm:$0xf]
        %v1045 = vld [vmem:[#allocation5 + $0x11c] sm:$0xf]
        %v1046 = vld [vmem:[#allocation5 + $0x120] sm:$0xf]
        %v1047 = vld [vmem:[#allocation5 + $0x124] sm:$0xf]
        %v1048 = vld [vmem:[#allocation5 + $0x128] sm:$0xf]
        %v1049 = vld [vmem:[#allocation5 + $0x12c] sm:$0xf]
        %v1050 = vld [vmem:[#allocation5 + $0x130] sm:$0xf]
        %v1051 = vld [vmem:[#allocation5 + $0x134] sm:$0xf]
        %v1052 = vld [vmem:[#allocation5 + $0x138] sm:$0xf]
        %v1053 = vld [vmem:[#allocation5 + $0x13c] sm:$0xf]
        %v1054 = vunpack.c.l.bf16 %v1038
        %v1055 = vunpack.c.l.bf16 %v1039
        %v1056 = vunpack.c.l.bf16 %v1040
        %v1057 = vunpack.c.l.bf16 %v1041
        %v1058 = vunpack.c.l.bf16 %v1042
        %v1059 = vunpack.c.l.bf16 %v1043
        %v1060 = vunpack.c.l.bf16 %v1044
        %v1061 = vunpack.c.l.bf16 %v1045
        %v1062 = vunpack.c.l.bf16 %v1046
        %v1063 = vunpack.c.l.bf16 %v1047
        %v1064 = vunpack.c.l.bf16 %v1048
        %v1065 = vunpack.c.l.bf16 %v1049
        %v1066 = vunpack.c.l.bf16 %v1050
        %v1067 = vunpack.c.l.bf16 %v1051
        %v1068 = vunpack.c.l.bf16 %v1052
        %v1069 = vunpack.c.l.bf16 %v1053
        %v1070 = vld [vmem:[%s3 + $0x3] sm:$0x1]
        %v1071 = vlaneseq
        %v1072 = vshrl.u32 %v1071, 7
        %v1073 = vsub.s32 0, %v1072
        %v1074 = vrot.slane %v1070, %v1073
        %1075 = vmatprep.subr.mxu0 0.0
        %1076 = vmatpush1.msra.mxu0 %v1054
        %1077 = vmatprep.subr.mxu0 0.0
        %1078 = vmatpush1.msra.mxu0 %v1055
        %1079 = vmatprep.subr.mxu0 0.0
        %1080 = vmatpush1.msra.mxu0 %v1056
        %1081 = vmatprep.subr.mxu0 0.0
        %1082 = vmatpush1.msra.mxu0 %v1057
        %1083 = vmatprep.subr.mxu0 0.0
        %1084 = vmatpush1.msra.mxu0 %v1058
        %1085 = vmatprep.subr.mxu0 0.0
        %1086 = vmatpush1.msra.mxu0 %v1059
        %1087 = vmatprep.subr.mxu0 0.0
        %1088 = vmatpush1.msra.mxu0 %v1060
        %1089 = vmatprep.subr.mxu0 0.0
        %1090 = vmatpush1.msra.mxu0 %v1061
        %1091 = vmatprep.subr.mxu0 0.0
        %1092 = vmatpush1.msra.mxu0 %v1062
        %1093 = vmatprep.subr.mxu0 0.0
        %1094 = vmatpush1.msra.mxu0 %v1063
        %1095 = vmatprep.subr.mxu0 0.0
        %1096 = vmatpush1.msra.mxu0 %v1064
        %1097 = vmatprep.subr.mxu0 0.0
        %1098 = vmatpush1.msra.mxu0 %v1065
        %1099 = vmatprep.subr.mxu0 0.0
        %1100 = vmatpush1.msra.mxu0 %v1066
        %1101 = vmatprep.subr.mxu0 0.0
        %1102 = vmatpush1.msra.mxu0 %v1067
        %1103 = vmatprep.subr.mxu0 0.0
        %1104 = vmatpush1.msra.mxu0 %v1068
        %1105 = vmatprep.subr.mxu0 0.0
        %1106 = vmatpush1.msra.mxu0 %v1069
        %1107 = vmatprep.subr.mxu0 0.0
        %1108 = vmatpush1.msra.mxu0 0.0
        %1109 = vmatprep.subr.mxu0 0.0
        %1110 = vmatpush1.msra.mxu0 0.0
        %1111 = vmatprep.subr.mxu0 0.0
        %1112 = vmatpush1.msra.mxu0 0.0
        %1113 = vmatprep.subr.mxu0 0.0
        %1114 = vmatpush1.msra.mxu0 0.0
        %1115 = vmatprep.subr.mxu0 0.0
        %1116 = vmatpush1.msra.mxu0 0.0
        %1117 = vmatprep.subr.mxu0 0.0
        %1118 = vmatpush1.msra.mxu0 0.0
        %1119 = vmatprep.subr.mxu0 0.0
        %1120 = vmatpush1.msra.mxu0 0.0
        %1121 = vmatprep.subr.mxu0 0.0
        %1122 = vmatpush1.msra.mxu0 0.0
        %1123 = vmatprep.subr.mxu0 0.0
        %1124 = vmatpush1.msra.mxu0 0.0
        %1125 = vmatprep.subr.mxu0 0.0
        %1126 = vmatpush1.msra.mxu0 0.0
        %1127 = vmatprep.subr.mxu0 0.0
        %1128 = vmatpush1.msra.mxu0 0.0
        %1129 = vmatprep.subr.mxu0 0.0
        %1130 = vmatpush1.msra.mxu0 0.0
        %1131 = vmatprep.subr.mxu0 0.0
        %1132 = vmatpush1.msra.mxu0 0.0
        %1133 = vmatprep.subr.mxu0 0.0
        %1134 = vmatpush1.msra.mxu0 0.0
        %1135 = vmatprep.subr.mxu0 0.0
        %1136 = vmatpush1.msra.mxu0 0.0
        %1137 = vmatprep.subr.mxu0 0.0
        %1138 = vmatpush1.msra.mxu0 0.0
        %1139 = vmatprep.mubr.f32.mxu0 0.0
        %1140 = vmatmul.mubr.f32.gmra.mrb[0].mxu0 %v976
        %v1141 = vpop.f32.mrb[0].mxu0
        %v1142 = vadd.f32 %v1074, %v1141
        %v1143 = vpop.f32.mrb[0].mxu0
        %1144 = vmatprep.mubr.f32.mxu0 0.0
        %1145 = vmatmul.mubr.f32.gmra.mrb[0].mxu0 %v979
        %v1146 = vpop.f32.mrb[0].mxu0
        %v1147 = vadd.f32 %v1074, %v1146
        %v1148 = vpop.f32.mrb[0].mxu0
        %1149 = vmatprep.mubr.f32.mxu0 0.0
        %1150 = vmatmul.mubr.f32.gmra.mrb[0].mxu0 %v984
        %v1151 = vpop.f32.mrb[0].mxu0
        %v1152 = vadd.f32 %v1074, %v1151
        %v1153 = vpop.f32.mrb[0].mxu0
        %1154 = vmatprep.mubr.f32.mxu0 0.0
        %1155 = vmatmul.mubr.f32.gmra.mrb[0].mxu0 %v987
        %v1156 = vpop.f32.mrb[0].mxu0
        %v1157 = vadd.f32 %v1074, %v1156
        %v1158 = vpop.f32.mrb[0].mxu0
        %1159 = vmatprep.mubr.f32.mxu0 0.0
        %1160 = vmatmul.mubr.f32.gmra.mrb[0].mxu0 %v992
        %v1161 = vpop.f32.mrb[0].mxu0
        %v1162 = vadd.f32 %v1074, %v1161
        %v1163 = vpop.f32.mrb[0].mxu0
        %1164 = vmatprep.mubr.f32.mxu0 0.0
        %1165 = vmatmul.mubr.f32.gmra.mrb[0].mxu0 %v995
        %v1166 = vpop.f32.mrb[0].mxu0
        %v1167 = vadd.f32 %v1074, %v1166
        %v1168 = vpop.f32.mrb[0].mxu0
        %1169 = vmatprep.mubr.f32.mxu0 0.0
        %1170 = vmatmul.mubr.f32.gmra.mrb[0].mxu0 %v1000
        %v1171 = vpop.f32.mrb[0].mxu0
        %v1172 = vadd.f32 %v1074, %v1171
        %v1173 = vpop.f32.mrb[0].mxu0
        %1174 = vmatprep.mubr.f32.mxu0 0.0
        %1175 = vmatmul.mubr.f32.gmra.mrb[0].mxu0 %v1003
        %v1176 = vpop.f32.mrb[0].mxu0
        %v1177 = vadd.f32 %v1074, %v1176
        %v1178 = vpop.f32.mrb[0].mxu0
        %1179 = vmatprep.mubr.f32.mxu0 0.0
        %1180 = vmatmul.mubr.f32.gmra.mrb[0].mxu0 %v1008
        %v1181 = vpop.f32.mrb[0].mxu0
        %v1182 = vadd.f32 %v1074, %v1181
        %v1183 = vpop.f32.mrb[0].mxu0
        %1184 = vmatprep.mubr.f32.mxu0 0.0
        %1185 = vmatmul.mubr.f32.gmra.mrb[0].mxu0 %v1011
        %v1186 = vpop.f32.mrb[0].mxu0
        %v1187 = vadd.f32 %v1074, %v1186
        %v1188 = vpop.f32.mrb[0].mxu0
        %1189 = vmatprep.mubr.f32.mxu0 0.0
        %1190 = vmatmul.mubr.f32.gmra.mrb[0].mxu0 %v1016
        %v1191 = vpop.f32.mrb[0].mxu0
        %v1192 = vadd.f32 %v1074, %v1191
        %v1193 = vpop.f32.mrb[0].mxu0
        %1194 = vmatprep.mubr.f32.mxu0 0.0
        %1195 = vmatmul.mubr.f32.gmra.mrb[0].mxu0 %v1019
        %v1196 = vpop.f32.mrb[0].mxu0
        %v1197 = vadd.f32 %v1074, %v1196
        %v1198 = vpop.f32.mrb[0].mxu0
        %1199 = vmatprep.mubr.f32.mxu0 0.0
        %1200 = vmatmul.mubr.f32.gmra.mrb[0].mxu0 %v1024
        %v1201 = vpop.f32.mrb[0].mxu0
        %v1202 = vadd.f32 %v1074, %v1201
        %v1203 = vpop.f32.mrb[0].mxu0
        %1204 = vmatprep.mubr.f32.mxu0 0.0
        %1205 = vmatmul.mubr.f32.gmra.mrb[0].mxu0 %v1027
        %v1206 = vpop.f32.mrb[0].mxu0
        %v1207 = vadd.f32 %v1074, %v1206
        %v1208 = vpop.f32.mrb[0].mxu0
        %1209 = vmatprep.mubr.f32.mxu0 0.0
        %1210 = vmatmul.mubr.f32.gmra.mrb[0].mxu0 %v1032
        %v1211 = vpop.f32.mrb[0].mxu0
        %v1212 = vadd.f32 %v1074, %v1211
        %v1213 = vpop.f32.mrb[0].mxu0
        %1214 = vmatprep.mubr.f32.mxu0 0.0
        %1215 = vmatmul.mubr.f32.gmra.mrb[0].mxu0 %v1035
        %v1216 = vpop.f32.mrb[0].mxu0
        %v1217 = vadd.f32 %v1074, %v1216
        %v1218 = vpop.f32.mrb[0].mxu0
        %1219 = vdwg.mxu0
        %v1220 = vtanh.pop %v1142
        %v1221 = vtanh.pop %v1147
        %v1222 = vtanh.pop %v1152
        %v1223 = vtanh.pop %v1157
        %v1224 = vtanh.pop %v1162
        %v1225 = vtanh.pop %v1167
        %v1226 = vtanh.pop %v1172
        %v1227 = vtanh.pop %v1177
        %v1228 = vtanh.pop %v1182
        %v1229 = vtanh.pop %v1187
        %v1230 = vtanh.pop %v1192
        %v1231 = vtanh.pop %v1197
        %v1232 = vtanh.pop %v1202
        %v1233 = vtanh.pop %v1207
        %v1234 = vtanh.pop %v1212
        %v1235 = vtanh.pop %v1217
        %v1236 = vpack.c.bf16 %v1221, %v1220
        %v1237 = vpack.c.bf16 %v1223, %v1222
        %v1238 = vpack.c.bf16 %v1225, %v1224
        %v1239 = vpack.c.bf16 %v1227, %v1226
        %v1240 = vpack.c.bf16 %v1229, %v1228
        %v1241 = vpack.c.bf16 %v1231, %v1230
        %v1242 = vpack.c.bf16 %v1233, %v1232
        %v1243 = vpack.c.bf16 %v1235, %v1234
        %v1244 = vld [vmem:[#allocation5 + $0x140] sm:$0xf]
        %v1245 = vld [vmem:[#allocation5 + $0x144] sm:$0xf]
        %v1246 = vld [vmem:[#allocation5 + $0x148] sm:$0xf]
        %v1247 = vld [vmem:[#allocation5 + $0x14c] sm:$0xf]
        %v1248 = vld [vmem:[#allocation5 + $0x150] sm:$0xf]
        %v1249 = vld [vmem:[#allocation5 + $0x154] sm:$0xf]
        %v1250 = vld [vmem:[#allocation5 + $0x158] sm:$0xf]
        %v1251 = vld [vmem:[#allocation5 + $0x15c] sm:$0xf]
        %v1252 = vld [vmem:[#allocation5 + $0x160] sm:$0xf]
        %v1253 = vld [vmem:[#allocation5 + $0x164] sm:$0xf]
        %v1254 = vld [vmem:[#allocation5 + $0x168] sm:$0xf]
        %v1255 = vld [vmem:[#allocation5 + $0x16c] sm:$0xf]
        %v1256 = vld [vmem:[#allocation5 + $0x170] sm:$0xf]
        %v1257 = vld [vmem:[#allocation5 + $0x174] sm:$0xf]
        %v1258 = vld [vmem:[#allocation5 + $0x178] sm:$0xf]
        %v1259 = vld [vmem:[#allocation5 + $0x17c] sm:$0xf]
        %v1260 = vld [vmem:[%s3 + $0x4] sm:$0x1]
        %v1261 = vlaneseq
        %v1262 = vshrl.u32 %v1261, 7
        %v1263 = vsub.s32 0, %v1262
        %v1264 = vrot.slane %v1260, %v1263
        %v1281 = vunpack.c.l.b16 %v1244
        %v1282 = vunpack.c.l.b16 %v1245
        %v1283 = vunpack.c.l.b16 %v1246
        %v1284 = vunpack.c.l.b16 %v1247
        %v1285 = vunpack.c.l.b16 %v1248
        %v1286 = vunpack.c.l.b16 %v1249
        %v1287 = vunpack.c.l.b16 %v1250
        %v1288 = vunpack.c.l.b16 %v1251
        %v1289 = vunpack.c.l.b16 %v1252
        %v1290 = vunpack.c.l.b16 %v1253
        %v1291 = vunpack.c.l.b16 %v1254
        %v1292 = vunpack.c.l.b16 %v1255
        %v1293 = vunpack.c.l.b16 %v1256
        %v1294 = vunpack.c.l.b16 %v1257
        %v1295 = vunpack.c.l.b16 %v1258
        %v1296 = vunpack.c.l.b16 %v1259
        %v1297 = vpack.c.b16 %v1282, %v1281
        %v1298 = vpack.c.b16 %v1284, %v1283
        %v1299 = vpack.c.b16 %v1286, %v1285
        %v1300 = vpack.c.b16 %v1288, %v1287
        %v1301 = vpack.c.b16 %v1290, %v1289
        %v1302 = vpack.c.b16 %v1292, %v1291
        %v1303 = vpack.c.b16 %v1294, %v1293
        %v1304 = vpack.c.b16 %v1296, %v1295
        %1313 = vmatprep.subr.bf16.mxu0 0
        %1314 = vmatpush1.bf16.msra.mxu0 %v1297
        %1315 = vmatprep.subr.bf16.mxu0 0
        %1316 = vmatpush1.bf16.msra.mxu0 %v1298
        %1317 = vmatprep.subr.bf16.mxu0 0
        %1318 = vmatpush1.bf16.msra.mxu0 %v1299
        %1319 = vmatprep.subr.bf16.mxu0 0
        %1320 = vmatpush1.bf16.msra.mxu0 %v1300
        %1321 = vmatprep.subr.bf16.mxu0 0
        %1322 = vmatpush1.bf16.msra.mxu0 %v1301
        %1323 = vmatprep.subr.bf16.mxu0 0
        %1324 = vmatpush1.bf16.msra.mxu0 %v1302
        %1325 = vmatprep.subr.bf16.mxu0 0
        %1326 = vmatpush1.bf16.msra.mxu0 %v1303
        %1327 = vmatprep.subr.bf16.mxu0 0
        %1328 = vmatpush1.bf16.msra.mxu0 %v1304
        %1329 = vmatprep.subr.bf16.mxu0 0
        %1330 = vmatpush1.bf16.msra.mxu0 0
        %1331 = vmatprep.subr.bf16.mxu0 0
        %1332 = vmatpush1.bf16.msra.mxu0 0
        %1333 = vmatprep.subr.bf16.mxu0 0
        %1334 = vmatpush1.bf16.msra.mxu0 0
        %1335 = vmatprep.subr.bf16.mxu0 0
        %1336 = vmatpush1.bf16.msra.mxu0 0
        %1337 = vmatprep.subr.bf16.mxu0 0
        %1338 = vmatpush1.bf16.msra.mxu0 0
        %1339 = vmatprep.subr.bf16.mxu0 0
        %1340 = vmatpush1.bf16.msra.mxu0 0
        %1341 = vmatprep.subr.bf16.mxu0 0
        %1342 = vmatpush1.bf16.msra.mxu0 0
        %1343 = vmatprep.subr.bf16.mxu0 0
        %1344 = vmatpush1.bf16.msra.mxu0 0
        %1345 = vmatprep.mubr.bf16.mxu0 0
        %1346 = vmatmul.mubr.bf16.gmra.mrb[0].mxu0 %v1236
        %v1347 = vpop.f32.mrb[0].mxu0
        %v1348 = vadd.f32 %v1264, %v1347
        %v1349 = vpop.f32.mrb[0].mxu0
        %v1350 = vpop.f32.mrb[0].mxu0
        %v1351 = vadd.f32 %v1264, %v1350
        %v1352 = vpop.f32.mrb[0].mxu0
        %1353 = vmatprep.mubr.bf16.mxu0 0
        %1354 = vmatmul.mubr.bf16.gmra.mrb[0].mxu0 %v1237
        %v1355 = vpop.f32.mrb[0].mxu0
        %v1356 = vadd.f32 %v1264, %v1355
        %v1357 = vpop.f32.mrb[0].mxu0
        %v1358 = vpop.f32.mrb[0].mxu0
        %v1359 = vadd.f32 %v1264, %v1358
        %v1360 = vpop.f32.mrb[0].mxu0
        %1361 = vmatprep.mubr.bf16.mxu0 0
        %1362 = vmatmul.mubr.bf16.gmra.mrb[0].mxu0 %v1238
        %v1363 = vpop.f32.mrb[0].mxu0
        %v1364 = vadd.f32 %v1264, %v1363
        %v1365 = vpop.f32.mrb[0].mxu0
        %v1366 = vpop.f32.mrb[0].mxu0
        %v1367 = vadd.f32 %v1264, %v1366
        %v1368 = vpop.f32.mrb[0].mxu0
        %1369 = vmatprep.mubr.bf16.mxu0 0
        %1370 = vmatmul.mubr.bf16.gmra.mrb[0].mxu0 %v1239
        %v1371 = vpop.f32.mrb[0].mxu0
        %v1372 = vadd.f32 %v1264, %v1371
        %v1373 = vpop.f32.mrb[0].mxu0
        %v1374 = vpop.f32.mrb[0].mxu0
        %v1375 = vadd.f32 %v1264, %v1374
        %v1376 = vpop.f32.mrb[0].mxu0
        %1377 = vmatprep.mubr.bf16.mxu0 0
        %1378 = vmatmul.mubr.bf16.gmra.mrb[0].mxu0 %v1240
        %v1379 = vpop.f32.mrb[0].mxu0
        %v1380 = vadd.f32 %v1264, %v1379
        %v1381 = vpop.f32.mrb[0].mxu0
        %v1382 = vpop.f32.mrb[0].mxu0
        %v1383 = vadd.f32 %v1264, %v1382
        %v1384 = vpop.f32.mrb[0].mxu0
        %1385 = vmatprep.mubr.bf16.mxu0 0
        %1386 = vmatmul.mubr.bf16.gmra.mrb[0].mxu0 %v1241
        %v1387 = vpop.f32.mrb[0].mxu0
        %v1388 = vadd.f32 %v1264, %v1387
        %v1389 = vpop.f32.mrb[0].mxu0
        %v1390 = vpop.f32.mrb[0].mxu0
        %v1391 = vadd.f32 %v1264, %v1390
        %v1392 = vpop.f32.mrb[0].mxu0
        %1393 = vmatprep.mubr.bf16.mxu0 0
        %1394 = vmatmul.mubr.bf16.gmra.mrb[0].mxu0 %v1242
        %v1395 = vpop.f32.mrb[0].mxu0
        %v1396 = vadd.f32 %v1264, %v1395
        %v1397 = vpop.f32.mrb[0].mxu0
        %v1398 = vpop.f32.mrb[0].mxu0
        %v1399 = vadd.f32 %v1264, %v1398
        %v1400 = vpop.f32.mrb[0].mxu0
        %1401 = vmatprep.mubr.bf16.mxu0 0
        %1402 = vmatmul.mubr.bf16.gmra.mrb[0].mxu0 %v1243
        %v1403 = vpop.f32.mrb[0].mxu0
        %v1404 = vadd.f32 %v1264, %v1403
        %v1405 = vpop.f32.mrb[0].mxu0
        %v1406 = vpop.f32.mrb[0].mxu0
        %v1407 = vadd.f32 %v1264, %v1406
        %v1408 = vpop.f32.mrb[0].mxu0
        %1409 = vdwg.mxu0
        %v1410 = vtanh.pop %v1348
        %v1411 = vtanh.pop %v1351
        %v1412 = vtanh.pop %v1356
        %v1413 = vtanh.pop %v1359
        %v1414 = vtanh.pop %v1364
        %v1415 = vtanh.pop %v1367
        %v1416 = vtanh.pop %v1372
        %v1417 = vtanh.pop %v1375
        %v1418 = vtanh.pop %v1380
        %v1419 = vtanh.pop %v1383
        %v1420 = vtanh.pop %v1388
        %v1421 = vtanh.pop %v1391
        %v1422 = vtanh.pop %v1396
        %v1423 = vtanh.pop %v1399
        %v1424 = vtanh.pop %v1404
        %v1425 = vtanh.pop %v1407
        %v1426 = vpack.c.bf16 %v1411, %v1410
        %v1427 = vpack.c.bf16 %v1413, %v1412
        %v1428 = vpack.c.bf16 %v1415, %v1414
        %v1429 = vpack.c.bf16 %v1417, %v1416
        %v1430 = vpack.c.bf16 %v1419, %v1418
        %v1431 = vpack.c.bf16 %v1421, %v1420
        %v1432 = vpack.c.bf16 %v1423, %v1422
        %v1433 = vpack.c.bf16 %v1425, %v1424
        %v1434 = vld [vmem:[#allocation7] sm:$0xff]
        %v1435 = vld [vmem:[#allocation7 + $0x8] sm:$0xff]
        %v1436 = vld [vmem:[#allocation7 + $0x10] sm:$0xff]
        %v1437 = vld [vmem:[#allocation7 + $0x18] sm:$0xff]
        %v1438 = vld [vmem:[#allocation7 + $0x20] sm:$0xff]
        %v1439 = vld [vmem:[#allocation7 + $0x28] sm:$0xff]
        %v1440 = vld [vmem:[#allocation7 + $0x30] sm:$0xff]
        %v1441 = vld [vmem:[#allocation7 + $0x38] sm:$0xff]
        %v1442 = vld [vmem:[#allocation7 + $0x40] sm:$0xff]
        %v1443 = vld [vmem:[#allocation7 + $0x48] sm:$0xff]
        %v1444 = vld [vmem:[#allocation7 + $0x50] sm:$0xff]
        %v1445 = vld [vmem:[#allocation7 + $0x58] sm:$0xff]
        %v1446 = vld [vmem:[#allocation7 + $0x60] sm:$0xff]
        %v1447 = vld [vmem:[#allocation7 + $0x68] sm:$0xff]
        %v1448 = vld [vmem:[#allocation7 + $0x70] sm:$0xff]
        %v1449 = vld [vmem:[#allocation7 + $0x78] sm:$0xff]
        %s1450 = scalar_lea.vmem [#allocation8], 260
        %v1451 = vld [vmem:[%s1450] ss:$8 sm:$0x3]
        %v1453 = vlaneseq
        %v1454 = vshrl.u32 %v1453, 7
        %v1455 = vsub.s32 0, %v1454
        %v1456 = vrot.slane %v1451, %v1455
        %v1457 = vlaneseq
        %v1458 = vshrl.u32 %v1457, 7
        %v1459 = vsub.s32 1, %v1458
        %v1460 = vrot.slane %v1451, %v1459
        %v1479 = vunpack.c.l.b16 %v1434
        %v1480 = vunpack.c.h.b16 %v1434
        %v1481 = vunpack.c.l.b16 %v1435
        %v1482 = vunpack.c.h.b16 %v1435
        %v1483 = vunpack.c.l.b16 %v1436
        %v1484 = vunpack.c.h.b16 %v1436
        %v1485 = vunpack.c.l.b16 %v1437
        %v1486 = vunpack.c.h.b16 %v1437
        %v1487 = vunpack.c.l.b16 %v1438
        %v1488 = vunpack.c.h.b16 %v1438
        %v1489 = vunpack.c.l.b16 %v1439
        %v1490 = vunpack.c.h.b16 %v1439
        %v1491 = vunpack.c.l.b16 %v1440
        %v1492 = vunpack.c.h.b16 %v1440
        %v1493 = vunpack.c.l.b16 %v1441
        %v1494 = vunpack.c.h.b16 %v1441
        %v1495 = vunpack.c.l.b16 %v1442
        %v1496 = vunpack.c.h.b16 %v1442
        %v1497 = vunpack.c.l.b16 %v1443
        %v1498 = vunpack.c.h.b16 %v1443
        %v1499 = vunpack.c.l.b16 %v1444
        %v1500 = vunpack.c.h.b16 %v1444
        %v1501 = vunpack.c.l.b16 %v1445
        %v1502 = vunpack.c.h.b16 %v1445
        %v1503 = vunpack.c.l.b16 %v1446
        %v1504 = vunpack.c.h.b16 %v1446
        %v1505 = vunpack.c.l.b16 %v1447
        %v1506 = vunpack.c.h.b16 %v1447
        %v1507 = vunpack.c.l.b16 %v1448
        %v1508 = vunpack.c.h.b16 %v1448
        %v1509 = vunpack.c.l.b16 %v1449
        %v1510 = vunpack.c.h.b16 %v1449
        %v1511 = vpack.c.b16 %v1481, %v1479
        %v1512 = vpack.c.b16 %v1482, %v1480
        %v1513 = vpack.c.b16 %v1485, %v1483
        %v1514 = vpack.c.b16 %v1486, %v1484
        %v1515 = vpack.c.b16 %v1489, %v1487
        %v1516 = vpack.c.b16 %v1490, %v1488
        %v1517 = vpack.c.b16 %v1493, %v1491
        %v1518 = vpack.c.b16 %v1494, %v1492
        %v1519 = vpack.c.b16 %v1497, %v1495
        %v1520 = vpack.c.b16 %v1498, %v1496
        %v1521 = vpack.c.b16 %v1501, %v1499
        %v1522 = vpack.c.b16 %v1502, %v1500
        %v1523 = vpack.c.b16 %v1505, %v1503
        %v1524 = vpack.c.b16 %v1506, %v1504
        %v1525 = vpack.c.b16 %v1509, %v1507
        %v1526 = vpack.c.b16 %v1510, %v1508
        %1543 = vmatprep.subr.bf16.mxu0 %v1512
        %1544 = vmatpush1.bf16.msra.mxu0 %v1511
        %1545 = vmatprep.subr.bf16.mxu0 %v1514
        %1546 = vmatpush1.bf16.msra.mxu0 %v1513
        %1547 = vmatprep.subr.bf16.mxu0 %v1516
        %1548 = vmatpush1.bf16.msra.mxu0 %v1515
        %1549 = vmatprep.subr.bf16.mxu0 %v1518
        %1550 = vmatpush1.bf16.msra.mxu0 %v1517
        %1551 = vmatprep.subr.bf16.mxu0 %v1520
        %1552 = vmatpush1.bf16.msra.mxu0 %v1519
        %1553 = vmatprep.subr.bf16.mxu0 %v1522
        %1554 = vmatpush1.bf16.msra.mxu0 %v1521
        %1555 = vmatprep.subr.bf16.mxu0 %v1524
        %1556 = vmatpush1.bf16.msra.mxu0 %v1523
        %1557 = vmatprep.subr.bf16.mxu0 %v1526
        %1558 = vmatpush1.bf16.msra.mxu0 %v1525
        %1559 = vmatprep.subr.bf16.mxu0 0
        %1560 = vmatpush1.bf16.msra.mxu0 0
        %1561 = vmatprep.subr.bf16.mxu0 0
        %1562 = vmatpush1.bf16.msra.mxu0 0
        %1563 = vmatprep.subr.bf16.mxu0 0
        %1564 = vmatpush1.bf16.msra.mxu0 0
        %1565 = vmatprep.subr.bf16.mxu0 0
        %1566 = vmatpush1.bf16.msra.mxu0 0
        %1567 = vmatprep.subr.bf16.mxu0 0
        %1568 = vmatpush1.bf16.msra.mxu0 0
        %1569 = vmatprep.subr.bf16.mxu0 0
        %1570 = vmatpush1.bf16.msra.mxu0 0
        %1571 = vmatprep.subr.bf16.mxu0 0
        %1572 = vmatpush1.bf16.msra.mxu0 0
        %1573 = vmatprep.subr.bf16.mxu0 0
        %1574 = vmatpush1.bf16.msra.mxu0 0
        %1575 = vmatprep.mubr.bf16.mxu0 0
        %1576 = vmatmul.mubr.bf16.gmra.mrb[0].mxu0 %v1426
        %v1577 = vpop.f32.mrb[0].mxu0
        %v1578 = vadd.f32 %v1456, %v1577
        %v1579 = vpop.f32.mrb[0].mxu0
        %v1580 = vadd.f32 %v1460, %v1579
        %v1581 = vpop.f32.mrb[0].mxu0
        %v1582 = vadd.f32 %v1456, %v1581
        %v1583 = vpop.f32.mrb[0].mxu0
        %v1584 = vadd.f32 %v1460, %v1583
        %1585 = vmatprep.mubr.bf16.mxu0 0
        %1586 = vmatmul.mubr.bf16.gmra.mrb[0].mxu0 %v1427
        %v1587 = vpop.f32.mrb[0].mxu0
        %v1588 = vadd.f32 %v1456, %v1587
        %v1589 = vpop.f32.mrb[0].mxu0
        %v1590 = vadd.f32 %v1460, %v1589
        %v1591 = vpop.f32.mrb[0].mxu0
        %v1592 = vadd.f32 %v1456, %v1591
        %v1593 = vpop.f32.mrb[0].mxu0
        %v1594 = vadd.f32 %v1460, %v1593
        %1595 = vmatprep.mubr.bf16.mxu0 0
        %1596 = vmatmul.mubr.bf16.gmra.mrb[0].mxu0 %v1428
        %v1597 = vpop.f32.mrb[0].mxu0
        %v1598 = vadd.f32 %v1456, %v1597
        %v1599 = vpop.f32.mrb[0].mxu0
        %v1600 = vadd.f32 %v1460, %v1599
        %v1601 = vpop.f32.mrb[0].mxu0
        %v1602 = vadd.f32 %v1456, %v1601
        %v1603 = vpop.f32.mrb[0].mxu0
        %v1604 = vadd.f32 %v1460, %v1603
        %1605 = vmatprep.mubr.bf16.mxu0 0
        %1606 = vmatmul.mubr.bf16.gmra.mrb[0].mxu0 %v1429
        %v1607 = vpop.f32.mrb[0].mxu0
        %v1608 = vadd.f32 %v1456, %v1607
        %v1609 = vpop.f32.mrb[0].mxu0
        %v1610 = vadd.f32 %v1460, %v1609
        %v1611 = vpop.f32.mrb[0].mxu0
        %v1612 = vadd.f32 %v1456, %v1611
        %v1613 = vpop.f32.mrb[0].mxu0
        %v1614 = vadd.f32 %v1460, %v1613
        %1615 = vmatprep.mubr.bf16.mxu0 0
        %1616 = vmatmul.mubr.bf16.gmra.mrb[0].mxu0 %v1430
        %v1617 = vpop.f32.mrb[0].mxu0
        %v1618 = vadd.f32 %v1456, %v1617
        %v1619 = vpop.f32.mrb[0].mxu0
        %v1620 = vadd.f32 %v1460, %v1619
        %v1621 = vpop.f32.mrb[0].mxu0
        %v1622 = vadd.f32 %v1456, %v1621
        %v1623 = vpop.f32.mrb[0].mxu0
        %v1624 = vadd.f32 %v1460, %v1623
        %1625 = vmatprep.mubr.bf16.mxu0 0
        %1626 = vmatmul.mubr.bf16.gmra.mrb[0].mxu0 %v1431
        %v1627 = vpop.f32.mrb[0].mxu0
        %v1628 = vadd.f32 %v1456, %v1627
        %v1629 = vpop.f32.mrb[0].mxu0
        %v1630 = vadd.f32 %v1460, %v1629
        %v1631 = vpop.f32.mrb[0].mxu0
        %v1632 = vadd.f32 %v1456, %v1631
        %v1633 = vpop.f32.mrb[0].mxu0
        %v1634 = vadd.f32 %v1460, %v1633
        %1635 = vmatprep.mubr.bf16.mxu0 0
        %1636 = vmatmul.mubr.bf16.gmra.mrb[0].mxu0 %v1432
        %v1637 = vpop.f32.mrb[0].mxu0
        %v1638 = vadd.f32 %v1456, %v1637
        %v1639 = vpop.f32.mrb[0].mxu0
        %v1640 = vadd.f32 %v1460, %v1639
        %v1641 = vpop.f32.mrb[0].mxu0
        %v1642 = vadd.f32 %v1456, %v1641
        %v1643 = vpop.f32.mrb[0].mxu0
        %v1644 = vadd.f32 %v1460, %v1643
        %1645 = vmatprep.mubr.bf16.mxu0 0
        %1646 = vmatmul.mubr.bf16.gmra.mrb[0].mxu0 %v1433
        %v1647 = vpop.f32.mrb[0].mxu0
        %v1648 = vadd.f32 %v1456, %v1647
        %v1649 = vpop.f32.mrb[0].mxu0
        %v1650 = vadd.f32 %v1460, %v1649
        %v1651 = vpop.f32.mrb[0].mxu0
        %v1652 = vadd.f32 %v1456, %v1651
        %v1653 = vpop.f32.mrb[0].mxu0
        %v1654 = vadd.f32 %v1460, %v1653
        %1655 = vdwg.mxu0
        %s1656 = scalar_lea.vmem [#allocation8], 259
        %v1657 = vld [vmem:[%s1656] ss:$8 sm:$0x3]
        %vm1658 = vcmp.gt.f32.partialorder %v1657, 0.5
        %s1659 = scalar_lea.vmem [#allocation8], 256
        %v1660 = vld [vmem:[%s1659] ss:$8 sm:$0x3]
        %v1662 = vlaneseq
        %v1663 = vshrl.u32 %v1662, 7
        %v1664 = vsub.s32 0, %v1663
        %v1665 = vrot.slane %v1660, %v1664
        %v1666 = vlaneseq
        %v1667 = vshrl.u32 %v1666, 7
        %v1668 = vsub.s32 1, %v1667
        %v1669 = vrot.slane %v1660, %v1668
        %v1672 = vadd.f32 %v1578, %v1665
        %v1673 = vadd.f32 %v1580, %v1669
        %v1674 = vadd.f32 %v1582, %v1665
        %v1675 = vadd.f32 %v1584, %v1669
        %v1676 = vadd.f32 %v1588, %v1665
        %v1677 = vadd.f32 %v1590, %v1669
        %v1678 = vadd.f32 %v1592, %v1665
        %v1679 = vadd.f32 %v1594, %v1669
        %v1680 = vadd.f32 %v1598, %v1665
        %v1681 = vadd.f32 %v1600, %v1669
        %v1682 = vadd.f32 %v1602, %v1665
        %v1683 = vadd.f32 %v1604, %v1669
        %v1684 = vadd.f32 %v1608, %v1665
        %v1685 = vadd.f32 %v1610, %v1669
        %v1686 = vadd.f32 %v1612, %v1665
        %v1687 = vadd.f32 %v1614, %v1669
        %v1688 = vadd.f32 %v1618, %v1665
        %v1689 = vadd.f32 %v1620, %v1669
        %v1690 = vadd.f32 %v1622, %v1665
        %v1691 = vadd.f32 %v1624, %v1669
        %v1692 = vadd.f32 %v1628, %v1665
        %v1693 = vadd.f32 %v1630, %v1669
        %v1694 = vadd.f32 %v1632, %v1665
        %v1695 = vadd.f32 %v1634, %v1669
        %v1696 = vadd.f32 %v1638, %v1665
        %v1697 = vadd.f32 %v1640, %v1669
        %v1698 = vadd.f32 %v1642, %v1665
        %v1699 = vadd.f32 %v1644, %v1669
        %v1700 = vadd.f32 %v1648, %v1665
        %v1701 = vadd.f32 %v1650, %v1669
        %v1702 = vadd.f32 %v1652, %v1665
        %v1703 = vadd.f32 %v1654, %v1669
        %v1704 = vmax.f32 %v1672, %v1673
        %1705 = vmax.xlane.f32.xlu0 %v1704
        %v1706 = vpop.xlane.xlu0 %1705
        %v1707 = vmax.f32 %v1674, %v1675
        %1708 = vmax.xlane.f32.xlu0 %v1707
        %v1709 = vpop.xlane.xlu0 %1708
        %v1710 = vmax.f32 %v1676, %v1677
        %1711 = vmax.xlane.f32.xlu0 %v1710
        %v1712 = vpop.xlane.xlu0 %1711
        %v1713 = vmax.f32 %v1678, %v1679
        %1714 = vmax.xlane.f32.xlu0 %v1713
        %v1715 = vpop.xlane.xlu0 %1714
        %v1716 = vmax.f32 %v1680, %v1681
        %1717 = vmax.xlane.f32.xlu0 %v1716
        %v1718 = vpop.xlane.xlu0 %1717
        %v1719 = vmax.f32 %v1682, %v1683
        %1720 = vmax.xlane.f32.xlu0 %v1719
        %v1721 = vpop.xlane.xlu0 %1720
        %v1722 = vmax.f32 %v1684, %v1685
        %1723 = vmax.xlane.f32.xlu0 %v1722
        %v1724 = vpop.xlane.xlu0 %1723
        %v1725 = vmax.f32 %v1686, %v1687
        %1726 = vmax.xlane.f32.xlu0 %v1725
        %v1727 = vpop.xlane.xlu0 %1726
        %v1728 = vmax.f32 %v1688, %v1689
        %1729 = vmax.xlane.f32.xlu0 %v1728
        %v1730 = vpop.xlane.xlu0 %1729
        %v1731 = vmax.f32 %v1690, %v1691
        %1732 = vmax.xlane.f32.xlu0 %v1731
        %v1733 = vpop.xlane.xlu0 %1732
        %v1734 = vmax.f32 %v1692, %v1693
        %1735 = vmax.xlane.f32.xlu0 %v1734
        %v1736 = vpop.xlane.xlu0 %1735
        %v1737 = vmax.f32 %v1694, %v1695
        %1738 = vmax.xlane.f32.xlu0 %v1737
        %v1739 = vpop.xlane.xlu0 %1738
        %v1740 = vmax.f32 %v1696, %v1697
        %1741 = vmax.xlane.f32.xlu0 %v1740
        %v1742 = vpop.xlane.xlu0 %1741
        %v1743 = vmax.f32 %v1698, %v1699
        %1744 = vmax.xlane.f32.xlu0 %v1743
        %v1745 = vpop.xlane.xlu0 %1744
        %v1746 = vmax.f32 %v1700, %v1701
        %1747 = vmax.xlane.f32.xlu0 %v1746
        %v1748 = vpop.xlane.xlu0 %1747
        %v1749 = vmax.f32 %v1702, %v1703
        %1750 = vmax.xlane.f32.xlu0 %v1749
        %v1751 = vpop.xlane.xlu0 %1750
        %v1752 = vld [vmem:[#allocation8] ss:$8 sm:$0x3]
        %v1754 = vlaneseq
        %v1755 = vshrl.u32 %v1754, 7
        %v1756 = vsub.s32 0, %v1755
        %v1757 = vrot.slane %v1752, %v1756
        %v1758 = vlaneseq
        %v1759 = vshrl.u32 %v1758, 7
        %v1760 = vsub.s32 1, %v1759
        %v1761 = vrot.slane %v1752, %v1760
        %v1764 = vmul.f32 %v1757, %v1706
        %v1765 = vmul.f32 %v1761, %v1706
        %v1766 = vmul.f32 %v1757, %v1709
        %v1767 = vmul.f32 %v1761, %v1709
        %v1768 = vmul.f32 %v1757, %v1712
        %v1769 = vmul.f32 %v1761, %v1712
        %v1770 = vmul.f32 %v1757, %v1715
        %v1771 = vmul.f32 %v1761, %v1715
        %v1772 = vmul.f32 %v1757, %v1718
        %v1773 = vmul.f32 %v1761, %v1718
        %v1774 = vmul.f32 %v1757, %v1721
        %v1775 = vmul.f32 %v1761, %v1721
        %v1776 = vmul.f32 %v1757, %v1724
        %v1777 = vmul.f32 %v1761, %v1724
        %v1778 = vmul.f32 %v1757, %v1727
        %v1779 = vmul.f32 %v1761, %v1727
        %v1780 = vmul.f32 %v1757, %v1730
        %v1781 = vmul.f32 %v1761, %v1730
        %v1782 = vmul.f32 %v1757, %v1733
        %v1783 = vmul.f32 %v1761, %v1733
        %v1784 = vmul.f32 %v1757, %v1736
        %v1785 = vmul.f32 %v1761, %v1736
        %v1786 = vmul.f32 %v1757, %v1739
        %v1787 = vmul.f32 %v1761, %v1739
        %v1788 = vmul.f32 %v1757, %v1742
        %v1789 = vmul.f32 %v1761, %v1742
        %v1790 = vmul.f32 %v1757, %v1745
        %v1791 = vmul.f32 %v1761, %v1745
        %v1792 = vmul.f32 %v1757, %v1748
        %v1793 = vmul.f32 %v1761, %v1748
        %v1794 = vmul.f32 %v1757, %v1751
        %v1795 = vmul.f32 %v1761, %v1751
        %v1796 = vadd.f32 %v1764, 0.0
        %v1797 = vadd.f32 %v1765, 0.0
        %v1798 = vadd.f32 %v1766, 0.0
        %v1799 = vadd.f32 %v1767, 0.0
        %v1800 = vadd.f32 %v1768, 0.0
        %v1801 = vadd.f32 %v1769, 0.0
        %v1802 = vadd.f32 %v1770, 0.0
        %v1803 = vadd.f32 %v1771, 0.0
        %v1804 = vadd.f32 %v1772, 0.0
        %v1805 = vadd.f32 %v1773, 0.0
        %v1806 = vadd.f32 %v1774, 0.0
        %v1807 = vadd.f32 %v1775, 0.0
        %v1808 = vadd.f32 %v1776, 0.0
        %v1809 = vadd.f32 %v1777, 0.0
        %v1810 = vadd.f32 %v1778, 0.0
        %v1811 = vadd.f32 %v1779, 0.0
        %v1812 = vadd.f32 %v1780, 0.0
        %v1813 = vadd.f32 %v1781, 0.0
        %v1814 = vadd.f32 %v1782, 0.0
        %v1815 = vadd.f32 %v1783, 0.0
        %v1816 = vadd.f32 %v1784, 0.0
        %v1817 = vadd.f32 %v1785, 0.0
        %v1818 = vadd.f32 %v1786, 0.0
        %v1819 = vadd.f32 %v1787, 0.0
        %v1820 = vadd.f32 %v1788, 0.0
        %v1821 = vadd.f32 %v1789, 0.0
        %v1822 = vadd.f32 %v1790, 0.0
        %v1823 = vadd.f32 %v1791, 0.0
        %v1824 = vadd.f32 %v1792, 0.0
        %v1825 = vadd.f32 %v1793, 0.0
        %v1826 = vadd.f32 %v1794, 0.0
        %v1827 = vadd.f32 %v1795, 0.0
        %s1828 = scalar_lea.vmem [#allocation8], 257
        %v1829 = vld [vmem:[%s1828] ss:$8 sm:$0x3]
        %v1831 = vlaneseq
        %v1832 = vshrl.u32 %v1831, 7
        %v1833 = vsub.s32 0, %v1832
        %v1834 = vrot.slane %v1829, %v1833
        %v1835 = vlaneseq
        %v1836 = vshrl.u32 %v1835, 7
        %v1837 = vsub.s32 1, %v1836
        %v1838 = vrot.slane %v1829, %v1837
        %v1841 = vadd.f32 %v1578, %v1834
        %v1842 = vadd.f32 %v1580, %v1838
        %v1843 = vadd.f32 %v1582, %v1834
        %v1844 = vadd.f32 %v1584, %v1838
        %v1845 = vadd.f32 %v1588, %v1834
        %v1846 = vadd.f32 %v1590, %v1838
        %v1847 = vadd.f32 %v1592, %v1834
        %v1848 = vadd.f32 %v1594, %v1838
        %v1849 = vadd.f32 %v1598, %v1834
        %v1850 = vadd.f32 %v1600, %v1838
        %v1851 = vadd.f32 %v1602, %v1834
        %v1852 = vadd.f32 %v1604, %v1838
        %v1853 = vadd.f32 %v1608, %v1834
        %v1854 = vadd.f32 %v1610, %v1838
        %v1855 = vadd.f32 %v1612, %v1834
        %v1856 = vadd.f32 %v1614, %v1838
        %v1857 = vadd.f32 %v1618, %v1834
        %v1858 = vadd.f32 %v1620, %v1838
        %v1859 = vadd.f32 %v1622, %v1834
        %v1860 = vadd.f32 %v1624, %v1838
        %v1861 = vadd.f32 %v1628, %v1834
        %v1862 = vadd.f32 %v1630, %v1838
        %v1863 = vadd.f32 %v1632, %v1834
        %v1864 = vadd.f32 %v1634, %v1838
        %v1865 = vadd.f32 %v1638, %v1834
        %v1866 = vadd.f32 %v1640, %v1838
        %v1867 = vadd.f32 %v1642, %v1834
        %v1868 = vadd.f32 %v1644, %v1838
        %v1869 = vadd.f32 %v1648, %v1834
        %v1870 = vadd.f32 %v1650, %v1838
        %v1871 = vadd.f32 %v1652, %v1834
        %v1872 = vadd.f32 %v1654, %v1838
        %v1873 = vmax.f32 %v1841, %v1842
        %1874 = vmax.xlane.f32.xlu0 %v1873
        %v1875 = vpop.xlane.xlu0 %1874
        %v1876 = vmax.f32 %v1843, %v1844
        %1877 = vmax.xlane.f32.xlu0 %v1876
        %v1878 = vpop.xlane.xlu0 %1877
        %v1879 = vmax.f32 %v1845, %v1846
        %1880 = vmax.xlane.f32.xlu0 %v1879
        %v1881 = vpop.xlane.xlu0 %1880
        %v1882 = vmax.f32 %v1847, %v1848
        %1883 = vmax.xlane.f32.xlu0 %v1882
        %v1884 = vpop.xlane.xlu0 %1883
        %v1885 = vmax.f32 %v1849, %v1850
        %1886 = vmax.xlane.f32.xlu0 %v1885
        %v1887 = vpop.xlane.xlu0 %1886
        %v1888 = vmax.f32 %v1851, %v1852
        %1889 = vmax.xlane.f32.xlu0 %v1888
        %v1890 = vpop.xlane.xlu0 %1889
        %v1891 = vmax.f32 %v1853, %v1854
        %1892 = vmax.xlane.f32.xlu0 %v1891
        %v1893 = vpop.xlane.xlu0 %1892
        %v1894 = vmax.f32 %v1855, %v1856
        %1895 = vmax.xlane.f32.xlu0 %v1894
        %v1896 = vpop.xlane.xlu0 %1895
        %v1897 = vmax.f32 %v1857, %v1858
        %1898 = vmax.xlane.f32.xlu0 %v1897
        %v1899 = vpop.xlane.xlu0 %1898
        %v1900 = vmax.f32 %v1859, %v1860
        %1901 = vmax.xlane.f32.xlu0 %v1900
        %v1902 = vpop.xlane.xlu0 %1901
        %v1903 = vmax.f32 %v1861, %v1862
        %1904 = vmax.xlane.f32.xlu0 %v1903
        %v1905 = vpop.xlane.xlu0 %1904
        %v1906 = vmax.f32 %v1863, %v1864
        %1907 = vmax.xlane.f32.xlu0 %v1906
        %v1908 = vpop.xlane.xlu0 %1907
        %v1909 = vmax.f32 %v1865, %v1866
        %1910 = vmax.xlane.f32.xlu0 %v1909
        %v1911 = vpop.xlane.xlu0 %1910
        %v1912 = vmax.f32 %v1867, %v1868
        %1913 = vmax.xlane.f32.xlu0 %v1912
        %v1914 = vpop.xlane.xlu0 %1913
        %v1915 = vmax.f32 %v1869, %v1870
        %1916 = vmax.xlane.f32.xlu0 %v1915
        %v1917 = vpop.xlane.xlu0 %1916
        %v1918 = vmax.f32 %v1871, %v1872
        %1919 = vmax.xlane.f32.xlu0 %v1918
        %v1920 = vpop.xlane.xlu0 %1919
        %s1921 = scalar_lea.vmem [#allocation8], 1
        %v1922 = vld [vmem:[%s1921] ss:$8 sm:$0x3]
        %v1924 = vlaneseq
        %v1925 = vshrl.u32 %v1924, 7
        %v1926 = vsub.s32 0, %v1925
        %v1927 = vrot.slane %v1922, %v1926
        %v1928 = vlaneseq
        %v1929 = vshrl.u32 %v1928, 7
        %v1930 = vsub.s32 1, %v1929
        %v1931 = vrot.slane %v1922, %v1930
        %v1934 = vmul.f32 %v1927, %v1875
        %v1935 = vmul.f32 %v1931, %v1875
        %v1936 = vmul.f32 %v1927, %v1878
        %v1937 = vmul.f32 %v1931, %v1878
        %v1938 = vmul.f32 %v1927, %v1881
        %v1939 = vmul.f32 %v1931, %v1881
        %v1940 = vmul.f32 %v1927, %v1884
        %v1941 = vmul.f32 %v1931, %v1884
        %v1942 = vmul.f32 %v1927, %v1887
        %v1943 = vmul.f32 %v1931, %v1887
        %v1944 = vmul.f32 %v1927, %v1890
        %v1945 = vmul.f32 %v1931, %v1890
        %v1946 = vmul.f32 %v1927, %v1893
        %v1947 = vmul.f32 %v1931, %v1893
        %v1948 = vmul.f32 %v1927, %v1896
        %v1949 = vmul.f32 %v1931, %v1896
        %v1950 = vmul.f32 %v1927, %v1899
        %v1951 = vmul.f32 %v1931, %v1899
        %v1952 = vmul.f32 %v1927, %v1902
        %v1953 = vmul.f32 %v1931, %v1902
        %v1954 = vmul.f32 %v1927, %v1905
        %v1955 = vmul.f32 %v1931, %v1905
        %v1956 = vmul.f32 %v1927, %v1908
        %v1957 = vmul.f32 %v1931, %v1908
        %v1958 = vmul.f32 %v1927, %v1911
        %v1959 = vmul.f32 %v1931, %v1911
        %v1960 = vmul.f32 %v1927, %v1914
        %v1961 = vmul.f32 %v1931, %v1914
        %v1962 = vmul.f32 %v1927, %v1917
        %v1963 = vmul.f32 %v1931, %v1917
        %v1964 = vmul.f32 %v1927, %v1920
        %v1965 = vmul.f32 %v1931, %v1920
        %v1966 = vadd.f32 %v1796, %v1934
        %v1967 = vadd.f32 %v1797, %v1935
        %v1968 = vadd.f32 %v1798, %v1936
        %v1969 = vadd.f32 %v1799, %v1937
        %v1970 = vadd.f32 %v1800, %v1938
        %v1971 = vadd.f32 %v1801, %v1939
        %v1972 = vadd.f32 %v1802, %v1940
        %v1973 = vadd.f32 %v1803, %v1941
        %v1974 = vadd.f32 %v1804, %v1942
        %v1975 = vadd.f32 %v1805, %v1943
        %v1976 = vadd.f32 %v1806, %v1944
        %v1977 = vadd.f32 %v1807, %v1945
        %v1978 = vadd.f32 %v1808, %v1946
        %v1979 = vadd.f32 %v1809, %v1947
        %v1980 = vadd.f32 %v1810, %v1948
        %v1981 = vadd.f32 %v1811, %v1949
        %v1982 = vadd.f32 %v1812, %v1950
        %v1983 = vadd.f32 %v1813, %v1951
        %v1984 = vadd.f32 %v1814, %v1952
        %v1985 = vadd.f32 %v1815, %v1953
        %v1986 = vadd.f32 %v1816, %v1954
        %v1987 = vadd.f32 %v1817, %v1955
        %v1988 = vadd.f32 %v1818, %v1956
        %v1989 = vadd.f32 %v1819, %v1957
        %v1990 = vadd.f32 %v1820, %v1958
        %v1991 = vadd.f32 %v1821, %v1959
        %v1992 = vadd.f32 %v1822, %v1960
        %v1993 = vadd.f32 %v1823, %v1961
        %v1994 = vadd.f32 %v1824, %v1962
        %v1995 = vadd.f32 %v1825, %v1963
        %v1996 = vadd.f32 %v1826, %v1964
        %v1997 = vadd.f32 %v1827, %v1965
        %s1998 = scalar_lea.vmem [#allocation8], 258
        %v1999 = vld [vmem:[%s1998] ss:$8 sm:$0x3]
        %v2001 = vlaneseq
        %v2002 = vshrl.u32 %v2001, 7
        %v2003 = vsub.s32 0, %v2002
        %v2004 = vrot.slane %v1999, %v2003
        %v2005 = vlaneseq
        %v2006 = vshrl.u32 %v2005, 7
        %v2007 = vsub.s32 1, %v2006
        %v2008 = vrot.slane %v1999, %v2007
        %v2011 = vadd.f32 %v1578, %v2004
        %v2012 = vadd.f32 %v1580, %v2008
        %v2013 = vadd.f32 %v1582, %v2004
        %v2014 = vadd.f32 %v1584, %v2008
        %v2015 = vadd.f32 %v1588, %v2004
        %v2016 = vadd.f32 %v1590, %v2008
        %v2017 = vadd.f32 %v1592, %v2004
        %v2018 = vadd.f32 %v1594, %v2008
        %v2019 = vadd.f32 %v1598, %v2004
        %v2020 = vadd.f32 %v1600, %v2008
        %v2021 = vadd.f32 %v1602, %v2004
        %v2022 = vadd.f32 %v1604, %v2008
        %v2023 = vadd.f32 %v1608, %v2004
        %v2024 = vadd.f32 %v1610, %v2008
        %v2025 = vadd.f32 %v1612, %v2004
        %v2026 = vadd.f32 %v1614, %v2008
        %v2027 = vadd.f32 %v1618, %v2004
        %v2028 = vadd.f32 %v1620, %v2008
        %v2029 = vadd.f32 %v1622, %v2004
        %v2030 = vadd.f32 %v1624, %v2008
        %v2031 = vadd.f32 %v1628, %v2004
        %v2032 = vadd.f32 %v1630, %v2008
        %v2033 = vadd.f32 %v1632, %v2004
        %v2034 = vadd.f32 %v1634, %v2008
        %v2035 = vadd.f32 %v1638, %v2004
        %v2036 = vadd.f32 %v1640, %v2008
        %v2037 = vadd.f32 %v1642, %v2004
        %v2038 = vadd.f32 %v1644, %v2008
        %v2039 = vadd.f32 %v1648, %v2004
        %v2040 = vadd.f32 %v1650, %v2008
        %v2041 = vadd.f32 %v1652, %v2004
        %v2042 = vadd.f32 %v1654, %v2008
        %v2043 = vmax.f32 %v2011, %v2012
        %2044 = vmax.xlane.f32.xlu0 %v2043
        %v2045 = vpop.xlane.xlu0 %2044
        %v2046 = vmax.f32 %v2013, %v2014
        %2047 = vmax.xlane.f32.xlu0 %v2046
        %v2048 = vpop.xlane.xlu0 %2047
        %v2049 = vmax.f32 %v2015, %v2016
        %2050 = vmax.xlane.f32.xlu0 %v2049
        %v2051 = vpop.xlane.xlu0 %2050
        %v2052 = vmax.f32 %v2017, %v2018
        %2053 = vmax.xlane.f32.xlu0 %v2052
        %v2054 = vpop.xlane.xlu0 %2053
        %v2055 = vmax.f32 %v2019, %v2020
        %2056 = vmax.xlane.f32.xlu0 %v2055
        %v2057 = vpop.xlane.xlu0 %2056
        %v2058 = vmax.f32 %v2021, %v2022
        %2059 = vmax.xlane.f32.xlu0 %v2058
        %v2060 = vpop.xlane.xlu0 %2059
        %v2061 = vmax.f32 %v2023, %v2024
        %2062 = vmax.xlane.f32.xlu0 %v2061
        %v2063 = vpop.xlane.xlu0 %2062
        %v2064 = vmax.f32 %v2025, %v2026
        %2065 = vmax.xlane.f32.xlu0 %v2064
        %v2066 = vpop.xlane.xlu0 %2065
        %v2067 = vmax.f32 %v2027, %v2028
        %2068 = vmax.xlane.f32.xlu0 %v2067
        %v2069 = vpop.xlane.xlu0 %2068
        %v2070 = vmax.f32 %v2029, %v2030
        %2071 = vmax.xlane.f32.xlu0 %v2070
        %v2072 = vpop.xlane.xlu0 %2071
        %v2073 = vmax.f32 %v2031, %v2032
        %2074 = vmax.xlane.f32.xlu0 %v2073
        %v2075 = vpop.xlane.xlu0 %2074
        %v2076 = vmax.f32 %v2033, %v2034
        %2077 = vmax.xlane.f32.xlu0 %v2076
        %v2078 = vpop.xlane.xlu0 %2077
        %v2079 = vmax.f32 %v2035, %v2036
        %2080 = vmax.xlane.f32.xlu0 %v2079
        %v2081 = vpop.xlane.xlu0 %2080
        %v2082 = vmax.f32 %v2037, %v2038
        %2083 = vmax.xlane.f32.xlu0 %v2082
        %v2084 = vpop.xlane.xlu0 %2083
        %v2085 = vmax.f32 %v2039, %v2040
        %2086 = vmax.xlane.f32.xlu0 %v2085
        %v2087 = vpop.xlane.xlu0 %2086
        %v2088 = vmax.f32 %v2041, %v2042
        %2089 = vmax.xlane.f32.xlu0 %v2088
        %v2090 = vpop.xlane.xlu0 %2089
        %s2091 = scalar_lea.vmem [#allocation8], 2
        %v2092 = vld [vmem:[%s2091] ss:$8 sm:$0x3]
        %v2094 = vlaneseq
        %v2095 = vshrl.u32 %v2094, 7
        %v2096 = vsub.s32 0, %v2095
        %v2097 = vrot.slane %v2092, %v2096
        %v2098 = vlaneseq
        %v2099 = vshrl.u32 %v2098, 7
        %v2100 = vsub.s32 1, %v2099
        %v2101 = vrot.slane %v2092, %v2100
        %v2104 = vmul.f32 %v2097, %v2045
        %v2105 = vmul.f32 %v2101, %v2045
        %v2106 = vmul.f32 %v2097, %v2048
        %v2107 = vmul.f32 %v2101, %v2048
        %v2108 = vmul.f32 %v2097, %v2051
        %v2109 = vmul.f32 %v2101, %v2051
        %v2110 = vmul.f32 %v2097, %v2054
        %v2111 = vmul.f32 %v2101, %v2054
        %v2112 = vmul.f32 %v2097, %v2057
        %v2113 = vmul.f32 %v2101, %v2057
        %v2114 = vmul.f32 %v2097, %v2060
        %v2115 = vmul.f32 %v2101, %v2060
        %v2116 = vmul.f32 %v2097, %v2063
        %v2117 = vmul.f32 %v2101, %v2063
        %v2118 = vmul.f32 %v2097, %v2066
        %v2119 = vmul.f32 %v2101, %v2066
        %v2120 = vmul.f32 %v2097, %v2069
        %v2121 = vmul.f32 %v2101, %v2069
        %v2122 = vmul.f32 %v2097, %v2072
        %v2123 = vmul.f32 %v2101, %v2072
        %v2124 = vmul.f32 %v2097, %v2075
        %v2125 = vmul.f32 %v2101, %v2075
        %v2126 = vmul.f32 %v2097, %v2078
        %v2127 = vmul.f32 %v2101, %v2078
        %v2128 = vmul.f32 %v2097, %v2081
        %v2129 = vmul.f32 %v2101, %v2081
        %v2130 = vmul.f32 %v2097, %v2084
        %v2131 = vmul.f32 %v2101, %v2084
        %v2132 = vmul.f32 %v2097, %v2087
        %v2133 = vmul.f32 %v2101, %v2087
        %v2134 = vmul.f32 %v2097, %v2090
        %v2135 = vmul.f32 %v2101, %v2090
        %v2136 = vadd.f32 %v1966, %v2104
        %v2137 = vadd.f32 %v1967, %v2105
        %v2138 = vadd.f32 %v1968, %v2106
        %v2139 = vadd.f32 %v1969, %v2107
        %v2140 = vadd.f32 %v1970, %v2108
        %v2141 = vadd.f32 %v1971, %v2109
        %v2142 = vadd.f32 %v1972, %v2110
        %v2143 = vadd.f32 %v1973, %v2111
        %v2144 = vadd.f32 %v1974, %v2112
        %v2145 = vadd.f32 %v1975, %v2113
        %v2146 = vadd.f32 %v1976, %v2114
        %v2147 = vadd.f32 %v1977, %v2115
        %v2148 = vadd.f32 %v1978, %v2116
        %v2149 = vadd.f32 %v1979, %v2117
        %v2150 = vadd.f32 %v1980, %v2118
        %v2151 = vadd.f32 %v1981, %v2119
        %v2152 = vadd.f32 %v1982, %v2120
        %v2153 = vadd.f32 %v1983, %v2121
        %v2154 = vadd.f32 %v1984, %v2122
        %v2155 = vadd.f32 %v1985, %v2123
        %v2156 = vadd.f32 %v1986, %v2124
        %v2157 = vadd.f32 %v1987, %v2125
        %v2158 = vadd.f32 %v1988, %v2126
        %v2159 = vadd.f32 %v1989, %v2127
        %v2160 = vadd.f32 %v1990, %v2128
        %v2161 = vadd.f32 %v1991, %v2129
        %v2162 = vadd.f32 %v1992, %v2130
        %v2163 = vadd.f32 %v1993, %v2131
        %v2164 = vadd.f32 %v1994, %v2132
        %v2165 = vadd.f32 %v1995, %v2133
        %v2166 = vadd.f32 %v1996, %v2134
        %v2167 = vadd.f32 %v1997, %v2135
        %v2168 = vsub.f32 %v1578, %v2136
        %v2169 = vsub.f32 %v1580, %v2137
        %v2170 = vsub.f32 %v1582, %v2138
        %v2171 = vsub.f32 %v1584, %v2139
        %v2172 = vsub.f32 %v1588, %v2140
        %v2173 = vsub.f32 %v1590, %v2141
        %v2174 = vsub.f32 %v1592, %v2142
        %v2175 = vsub.f32 %v1594, %v2143
        %v2176 = vsub.f32 %v1598, %v2144
        %v2177 = vsub.f32 %v1600, %v2145
        %v2178 = vsub.f32 %v1602, %v2146
        %v2179 = vsub.f32 %v1604, %v2147
        %v2180 = vsub.f32 %v1608, %v2148
        %v2181 = vsub.f32 %v1610, %v2149
        %v2182 = vsub.f32 %v1612, %v2150
        %v2183 = vsub.f32 %v1614, %v2151
        %v2184 = vsub.f32 %v1618, %v2152
        %v2185 = vsub.f32 %v1620, %v2153
        %v2186 = vsub.f32 %v1622, %v2154
        %v2187 = vsub.f32 %v1624, %v2155
        %v2188 = vsub.f32 %v1628, %v2156
        %v2189 = vsub.f32 %v1630, %v2157
        %v2190 = vsub.f32 %v1632, %v2158
        %v2191 = vsub.f32 %v1634, %v2159
        %v2192 = vsub.f32 %v1638, %v2160
        %v2193 = vsub.f32 %v1640, %v2161
        %v2194 = vsub.f32 %v1642, %v2162
        %v2195 = vsub.f32 %v1644, %v2163
        %v2196 = vsub.f32 %v1648, %v2164
        %v2197 = vsub.f32 %v1650, %v2165
        %v2198 = vsub.f32 %v1652, %v2166
        %v2199 = vsub.f32 %v1654, %v2167
        %v2200 = vsel %vm1658, 1, 0
        %v2201 = vlaneseq
        %v2202 = vshrl.u32 %v2201, 7
        %v2203 = vsub.s32 0, %v2202
        %v2204 = vrot.slane %v2200, %v2203
        %v2205 = vlaneseq
        %v2206 = vshrl.u32 %v2205, 7
        %v2207 = vsub.s32 1, %v2206
        %v2208 = vrot.slane %v2200, %v2207
        %vm2209 = vcmp.eq.s32.totalorder %v2204, 1
        %vm2210 = vcmp.eq.s32.totalorder %v2208, 1
        %v2211 = vsel %vm2209, %v2168, 0.0
        %v2212 = vsel %vm2210, %v2169, 0.0
        %v2213 = vsel %vm2209, %v2170, 0.0
        %v2214 = vsel %vm2210, %v2171, 0.0
        %v2215 = vsel %vm2209, %v2172, 0.0
        %v2216 = vsel %vm2210, %v2173, 0.0
        %v2217 = vsel %vm2209, %v2174, 0.0
        %v2218 = vsel %vm2210, %v2175, 0.0
        %v2219 = vsel %vm2209, %v2176, 0.0
        %v2220 = vsel %vm2210, %v2177, 0.0
        %v2221 = vsel %vm2209, %v2178, 0.0
        %v2222 = vsel %vm2210, %v2179, 0.0
        %v2223 = vsel %vm2209, %v2180, 0.0
        %v2224 = vsel %vm2210, %v2181, 0.0
        %v2225 = vsel %vm2209, %v2182, 0.0
        %v2226 = vsel %vm2210, %v2183, 0.0
        %v2227 = vsel %vm2209, %v2184, 0.0
        %v2228 = vsel %vm2210, %v2185, 0.0
        %v2229 = vsel %vm2209, %v2186, 0.0
        %v2230 = vsel %vm2210, %v2187, 0.0
        %v2231 = vsel %vm2209, %v2188, 0.0
        %v2232 = vsel %vm2210, %v2189, 0.0
        %v2233 = vsel %vm2209, %v2190, 0.0
        %v2234 = vsel %vm2210, %v2191, 0.0
        %v2235 = vsel %vm2209, %v2192, 0.0
        %v2236 = vsel %vm2210, %v2193, 0.0
        %v2237 = vsel %vm2209, %v2194, 0.0
        %v2238 = vsel %vm2210, %v2195, 0.0
        %v2239 = vsel %vm2209, %v2196, 0.0
        %v2240 = vsel %vm2210, %v2197, 0.0
        %v2241 = vsel %vm2209, %v2198, 0.0
        %v2242 = vsel %vm2210, %v2199, 0.0
        %v2243 = vmul.f32 %v2211, 1.442695
        %v2244 = vpow.pop %v2243
        %v2245 = vmul.f32 %v2212, 1.442695
        %v2246 = vpow.pop %v2245
        %v2247 = vmul.f32 %v2213, 1.442695
        %v2248 = vpow.pop %v2247
        %v2249 = vmul.f32 %v2214, 1.442695
        %v2250 = vpow.pop %v2249
        %v2251 = vmul.f32 %v2215, 1.442695
        %v2252 = vpow.pop %v2251
        %v2253 = vmul.f32 %v2216, 1.442695
        %v2254 = vpow.pop %v2253
        %v2255 = vmul.f32 %v2217, 1.442695
        %v2256 = vpow.pop %v2255
        %v2257 = vmul.f32 %v2218, 1.442695
        %v2258 = vpow.pop %v2257
        %v2259 = vmul.f32 %v2219, 1.442695
        %v2260 = vpow.pop %v2259
        %v2261 = vmul.f32 %v2220, 1.442695
        %v2262 = vpow.pop %v2261
        %v2263 = vmul.f32 %v2221, 1.442695
        %v2264 = vpow.pop %v2263
        %v2265 = vmul.f32 %v2222, 1.442695
        %v2266 = vpow.pop %v2265
        %v2267 = vmul.f32 %v2223, 1.442695
        %v2268 = vpow.pop %v2267
        %v2269 = vmul.f32 %v2224, 1.442695
        %v2270 = vpow.pop %v2269
        %v2271 = vmul.f32 %v2225, 1.442695
        %v2272 = vpow.pop %v2271
        %v2273 = vmul.f32 %v2226, 1.442695
        %v2274 = vpow.pop %v2273
        %v2275 = vmul.f32 %v2227, 1.442695
        %v2276 = vpow.pop %v2275
        %v2277 = vmul.f32 %v2228, 1.442695
        %v2278 = vpow.pop %v2277
        %v2279 = vmul.f32 %v2229, 1.442695
        %v2280 = vpow.pop %v2279
        %v2281 = vmul.f32 %v2230, 1.442695
        %v2282 = vpow.pop %v2281
        %v2283 = vmul.f32 %v2231, 1.442695
        %v2284 = vpow.pop %v2283
        %v2285 = vmul.f32 %v2232, 1.442695
        %v2286 = vpow.pop %v2285
        %v2287 = vmul.f32 %v2233, 1.442695
        %v2288 = vpow.pop %v2287
        %v2289 = vmul.f32 %v2234, 1.442695
        %v2290 = vpow.pop %v2289
        %v2291 = vmul.f32 %v2235, 1.442695
        %v2292 = vpow.pop %v2291
        %v2293 = vmul.f32 %v2236, 1.442695
        %v2294 = vpow.pop %v2293
        %v2295 = vmul.f32 %v2237, 1.442695
        %v2296 = vpow.pop %v2295
        %v2297 = vmul.f32 %v2238, 1.442695
        %v2298 = vpow.pop %v2297
        %v2299 = vmul.f32 %v2239, 1.442695
        %v2300 = vpow.pop %v2299
        %v2301 = vmul.f32 %v2240, 1.442695
        %v2302 = vpow.pop %v2301
        %v2303 = vmul.f32 %v2241, 1.442695
        %v2304 = vpow.pop %v2303
        %v2305 = vmul.f32 %v2242, 1.442695
        %v2306 = vpow.pop %v2305
        %v2307 = vld [vmem:[#allocation10] sm:$0xff]
        %v2308 = vld [vmem:[#allocation10 + $0x8] sm:$0xff]
        %v2309 = vld [vmem:[#allocation10 + $0x10] sm:$0xff]
        %v2310 = vld [vmem:[#allocation10 + $0x18] sm:$0xff]
        %v2311 = vld [vmem:[#allocation10 + $0x20] sm:$0xff]
        %v2312 = vld [vmem:[#allocation10 + $0x28] sm:$0xff]
        %v2313 = vld [vmem:[#allocation10 + $0x30] sm:$0xff]
        %v2314 = vld [vmem:[#allocation10 + $0x38] sm:$0xff]
        %v2315 = vld [vmem:[#allocation10 + $0x40] sm:$0xff]
        %v2316 = vld [vmem:[#allocation10 + $0x48] sm:$0xff]
        %v2317 = vld [vmem:[#allocation10 + $0x50] sm:$0xff]
        %v2318 = vld [vmem:[#allocation10 + $0x58] sm:$0xff]
        %v2319 = vld [vmem:[#allocation10 + $0x60] sm:$0xff]
        %v2320 = vld [vmem:[#allocation10 + $0x68] sm:$0xff]
        %v2321 = vld [vmem:[#allocation10 + $0x70] sm:$0xff]
        %v2322 = vld [vmem:[#allocation10 + $0x78] sm:$0xff]
        %v2323 = vld [vmem:[#allocation10 + $0x80] sm:$0xff]
        %v2324 = vld [vmem:[#allocation10 + $0x88] sm:$0xff]
        %v2325 = vld [vmem:[#allocation10 + $0x90] sm:$0xff]
        %v2326 = vld [vmem:[#allocation10 + $0x98] sm:$0xff]
        %v2327 = vld [vmem:[#allocation10 + $0xa0] sm:$0xff]
        %v2328 = vld [vmem:[#allocation10 + $0xa8] sm:$0xff]
        %v2329 = vld [vmem:[#allocation10 + $0xb0] sm:$0xff]
        %v2330 = vld [vmem:[#allocation10 + $0xb8] sm:$0xff]
        %v2331 = vld [vmem:[#allocation10 + $0xc0] sm:$0xff]
        %v2332 = vld [vmem:[#allocation10 + $0xc8] sm:$0xff]
        %v2333 = vld [vmem:[#allocation10 + $0xd0] sm:$0xff]
        %v2334 = vld [vmem:[#allocation10 + $0xd8] sm:$0xff]
        %v2335 = vld [vmem:[#allocation10 + $0xe0] sm:$0xff]
        %v2336 = vld [vmem:[#allocation10 + $0xe8] sm:$0xff]
        %v2337 = vld [vmem:[#allocation10 + $0xf0] sm:$0xff]
        %v2338 = vld [vmem:[#allocation10 + $0xf8] sm:$0xff]
        %2339 = vmatprep.subr.mxu0 0.0
        %2340 = vmatpush1.msra.mxu0 %v2307
        %2341 = vmatprep.subr.mxu0 0.0
        %2342 = vmatpush1.msra.mxu0 %v2308
        %2343 = vmatprep.subr.mxu0 0.0
        %2344 = vmatpush1.msra.mxu0 %v2309
        %2345 = vmatprep.subr.mxu0 0.0
        %2346 = vmatpush1.msra.mxu0 %v2310
        %2347 = vmatprep.subr.mxu0 0.0
        %2348 = vmatpush1.msra.mxu0 %v2311
        %2349 = vmatprep.subr.mxu0 0.0
        %2350 = vmatpush1.msra.mxu0 %v2312
        %2351 = vmatprep.subr.mxu0 0.0
        %2352 = vmatpush1.msra.mxu0 %v2313
        %2353 = vmatprep.subr.mxu0 0.0
        %2354 = vmatpush1.msra.mxu0 %v2314
        %2355 = vmatprep.subr.mxu0 0.0
        %2356 = vmatpush1.msra.mxu0 %v2315
        %2357 = vmatprep.subr.mxu0 0.0
        %2358 = vmatpush1.msra.mxu0 %v2316
        %2359 = vmatprep.subr.mxu0 0.0
        %2360 = vmatpush1.msra.mxu0 %v2317
        %2361 = vmatprep.subr.mxu0 0.0
        %2362 = vmatpush1.msra.mxu0 %v2318
        %2363 = vmatprep.subr.mxu0 0.0
        %2364 = vmatpush1.msra.mxu0 %v2319
        %2365 = vmatprep.subr.mxu0 0.0
        %2366 = vmatpush1.msra.mxu0 %v2320
        %2367 = vmatprep.subr.mxu0 0.0
        %2368 = vmatpush1.msra.mxu0 %v2321
        %2369 = vmatprep.subr.mxu0 0.0
        %2370 = vmatpush1.msra.mxu0 %v2322
        %2371 = vmatprep.subr.mxu0 0.0
        %2372 = vmatpush1.msra.mxu0 %v2323
        %2373 = vmatprep.subr.mxu0 0.0
        %2374 = vmatpush1.msra.mxu0 %v2324
        %2375 = vmatprep.subr.mxu0 0.0
        %2376 = vmatpush1.msra.mxu0 %v2325
        %2377 = vmatprep.subr.mxu0 0.0
        %2378 = vmatpush1.msra.mxu0 %v2326
        %2379 = vmatprep.subr.mxu0 0.0
        %2380 = vmatpush1.msra.mxu0 %v2327
        %2381 = vmatprep.subr.mxu0 0.0
        %2382 = vmatpush1.msra.mxu0 %v2328
        %2383 = vmatprep.subr.mxu0 0.0
        %2384 = vmatpush1.msra.mxu0 %v2329
        %2385 = vmatprep.subr.mxu0 0.0
        %2386 = vmatpush1.msra.mxu0 %v2330
        %2387 = vmatprep.subr.mxu0 0.0
        %2388 = vmatpush1.msra.mxu0 %v2331
        %2389 = vmatprep.subr.mxu0 0.0
        %2390 = vmatpush1.msra.mxu0 %v2332
        %2391 = vmatprep.subr.mxu0 0.0
        %2392 = vmatpush1.msra.mxu0 %v2333
        %2393 = vmatprep.subr.mxu0 0.0
        %2394 = vmatpush1.msra.mxu0 %v2334
        %2395 = vmatprep.subr.mxu0 0.0
        %2396 = vmatpush1.msra.mxu0 %v2335
        %2397 = vmatprep.subr.mxu0 0.0
        %2398 = vmatpush1.msra.mxu0 %v2336
        %2399 = vmatprep.subr.mxu0 0.0
        %2400 = vmatpush1.msra.mxu0 %v2337
        %2401 = vmatprep.subr.mxu0 0.0
        %2402 = vmatpush1.msra.mxu0 %v2338
        %2403 = vmatprep.mubr.f32.mxu0 %v2246
        %2404 = vmatmul.mubr.f32.gmra.mrb[0].mxu0 %v2244
        %v2405 = vpop.f32.mrb[0].mxu0
        %v2406 = vadd.f32 0.0, %v2405
        %v2407 = vpop.f32.mrb[0].mxu0
        %2408 = vmatprep.mubr.f32.mxu0 %v2250
        %2409 = vmatmul.mubr.f32.gmra.mrb[0].mxu0 %v2248
        %v2410 = vpop.f32.mrb[0].mxu0
        %v2411 = vadd.f32 0.0, %v2410
        %v2412 = vpop.f32.mrb[0].mxu0
        %2413 = vmatprep.mubr.f32.mxu0 %v2254
        %2414 = vmatmul.mubr.f32.gmra.mrb[0].mxu0 %v2252
        %v2415 = vpop.f32.mrb[0].mxu0
        %v2416 = vadd.f32 0.0, %v2415
        %v2417 = vpop.f32.mrb[0].mxu0
        %2418 = vmatprep.mubr.f32.mxu0 %v2258
        %2419 = vmatmul.mubr.f32.gmra.mrb[0].mxu0 %v2256
        %v2420 = vpop.f32.mrb[0].mxu0
        %v2421 = vadd.f32 0.0, %v2420
        %v2422 = vpop.f32.mrb[0].mxu0
        %2423 = vmatprep.mubr.f32.mxu0 %v2262
        %2424 = vmatmul.mubr.f32.gmra.mrb[0].mxu0 %v2260
        %v2425 = vpop.f32.mrb[0].mxu0
        %v2426 = vadd.f32 0.0, %v2425
        %v2427 = vpop.f32.mrb[0].mxu0
        %2428 = vmatprep.mubr.f32.mxu0 %v2266
        %2429 = vmatmul.mubr.f32.gmra.mrb[0].mxu0 %v2264
        %v2430 = vpop.f32.mrb[0].mxu0
        %v2431 = vadd.f32 0.0, %v2430
        %v2432 = vpop.f32.mrb[0].mxu0
        %2433 = vmatprep.mubr.f32.mxu0 %v2270
        %2434 = vmatmul.mubr.f32.gmra.mrb[0].mxu0 %v2268
        %v2435 = vpop.f32.mrb[0].mxu0
        %v2436 = vadd.f32 0.0, %v2435
        %v2437 = vpop.f32.mrb[0].mxu0
        %2438 = vmatprep.mubr.f32.mxu0 %v2274
        %2439 = vmatmul.mubr.f32.gmra.mrb[0].mxu0 %v2272
        %v2440 = vpop.f32.mrb[0].mxu0
        %v2441 = vadd.f32 0.0, %v2440
        %v2442 = vpop.f32.mrb[0].mxu0
        %2443 = vmatprep.mubr.f32.mxu0 %v2278
        %2444 = vmatmul.mubr.f32.gmra.mrb[0].mxu0 %v2276
        %v2445 = vpop.f32.mrb[0].mxu0
        %v2446 = vadd.f32 0.0, %v2445
        %v2447 = vpop.f32.mrb[0].mxu0
        %2448 = vmatprep.mubr.f32.mxu0 %v2282
        %2449 = vmatmul.mubr.f32.gmra.mrb[0].mxu0 %v2280
        %v2450 = vpop.f32.mrb[0].mxu0
        %v2451 = vadd.f32 0.0, %v2450
        %v2452 = vpop.f32.mrb[0].mxu0
        %2453 = vmatprep.mubr.f32.mxu0 %v2286
        %2454 = vmatmul.mubr.f32.gmra.mrb[0].mxu0 %v2284
        %v2455 = vpop.f32.mrb[0].mxu0
        %v2456 = vadd.f32 0.0, %v2455
        %v2457 = vpop.f32.mrb[0].mxu0
        %2458 = vmatprep.mubr.f32.mxu0 %v2290
        %2459 = vmatmul.mubr.f32.gmra.mrb[0].mxu0 %v2288
        %v2460 = vpop.f32.mrb[0].mxu0
        %v2461 = vadd.f32 0.0, %v2460
        %v2462 = vpop.f32.mrb[0].mxu0
        %2463 = vmatprep.mubr.f32.mxu0 %v2294
        %2464 = vmatmul.mubr.f32.gmra.mrb[0].mxu0 %v2292
        %v2465 = vpop.f32.mrb[0].mxu0
        %v2466 = vadd.f32 0.0, %v2465
        %v2467 = vpop.f32.mrb[0].mxu0
        %2468 = vmatprep.mubr.f32.mxu0 %v2298
        %2469 = vmatmul.mubr.f32.gmra.mrb[0].mxu0 %v2296
        %v2470 = vpop.f32.mrb[0].mxu0
        %v2471 = vadd.f32 0.0, %v2470
        %v2472 = vpop.f32.mrb[0].mxu0
        %2473 = vmatprep.mubr.f32.mxu0 %v2302
        %2474 = vmatmul.mubr.f32.gmra.mrb[0].mxu0 %v2300
        %v2475 = vpop.f32.mrb[0].mxu0
        %v2476 = vadd.f32 0.0, %v2475
        %v2477 = vpop.f32.mrb[0].mxu0
        %2478 = vmatprep.mubr.f32.mxu0 %v2306
        %2479 = vmatmul.mubr.f32.gmra.mrb[0].mxu0 %v2304
        %v2480 = vpop.f32.mrb[0].mxu0
        %v2481 = vadd.f32 0.0, %v2480
        %v2482 = vpop.f32.mrb[0].mxu0
        %2483 = vdwg.mxu0
        %vm2484 = vcmp.gt.f32.partialorder %v2406, 0.0
        %vm2485 = vcmp.gt.f32.partialorder %v2411, 0.0
        %vm2486 = vcmp.gt.f32.partialorder %v2416, 0.0
        %vm2487 = vcmp.gt.f32.partialorder %v2421, 0.0
        %vm2488 = vcmp.gt.f32.partialorder %v2426, 0.0
        %vm2489 = vcmp.gt.f32.partialorder %v2431, 0.0
        %vm2490 = vcmp.gt.f32.partialorder %v2436, 0.0
        %vm2491 = vcmp.gt.f32.partialorder %v2441, 0.0
        %vm2492 = vcmp.gt.f32.partialorder %v2446, 0.0
        %vm2493 = vcmp.gt.f32.partialorder %v2451, 0.0
        %vm2494 = vcmp.gt.f32.partialorder %v2456, 0.0
        %vm2495 = vcmp.gt.f32.partialorder %v2461, 0.0
        %vm2496 = vcmp.gt.f32.partialorder %v2466, 0.0
        %vm2497 = vcmp.gt.f32.partialorder %v2471, 0.0
        %vm2498 = vcmp.gt.f32.partialorder %v2476, 0.0
        %vm2499 = vcmp.gt.f32.partialorder %v2481, 0.0
        %v2500 = vsel %vm2484, %v2406, 1.0
        %v2501 = vsel %vm2485, %v2411, 1.0
        %v2502 = vsel %vm2486, %v2416, 1.0
        %v2503 = vsel %vm2487, %v2421, 1.0
        %v2504 = vsel %vm2488, %v2426, 1.0
        %v2505 = vsel %vm2489, %v2431, 1.0
        %v2506 = vsel %vm2490, %v2436, 1.0
        %v2507 = vsel %vm2491, %v2441, 1.0
        %v2508 = vsel %vm2492, %v2446, 1.0
        %v2509 = vsel %vm2493, %v2451, 1.0
        %v2510 = vsel %vm2494, %v2456, 1.0
        %v2511 = vsel %vm2495, %v2461, 1.0
        %v2512 = vsel %vm2496, %v2466, 1.0
        %v2513 = vsel %vm2497, %v2471, 1.0
        %v2514 = vsel %vm2498, %v2476, 1.0
        %v2515 = vsel %vm2499, %v2481, 1.0
        %v2516 = vrcp.pop %v2500
        %v2517 = vmul.f32 1.0, %v2516
        %v2518 = vrcp.pop %v2501
        %v2519 = vmul.f32 1.0, %v2518
        %v2520 = vrcp.pop %v2502
        %v2521 = vmul.f32 1.0, %v2520
        %v2522 = vrcp.pop %v2503
        %v2523 = vmul.f32 1.0, %v2522
        %v2524 = vrcp.pop %v2504
        %v2525 = vmul.f32 1.0, %v2524
        %v2526 = vrcp.pop %v2505
        %v2527 = vmul.f32 1.0, %v2526
        %v2528 = vrcp.pop %v2506
        %v2529 = vmul.f32 1.0, %v2528
        %v2530 = vrcp.pop %v2507
        %v2531 = vmul.f32 1.0, %v2530
        %v2532 = vrcp.pop %v2508
        %v2533 = vmul.f32 1.0, %v2532
        %v2534 = vrcp.pop %v2509
        %v2535 = vmul.f32 1.0, %v2534
        %v2536 = vrcp.pop %v2510
        %v2537 = vmul.f32 1.0, %v2536
        %v2538 = vrcp.pop %v2511
        %v2539 = vmul.f32 1.0, %v2538
        %v2540 = vrcp.pop %v2512
        %v2541 = vmul.f32 1.0, %v2540
        %v2542 = vrcp.pop %v2513
        %v2543 = vmul.f32 1.0, %v2542
        %v2544 = vrcp.pop %v2514
        %v2545 = vmul.f32 1.0, %v2544
        %v2546 = vrcp.pop %v2515
        %v2547 = vmul.f32 1.0, %v2546
        %v2548 = vld [vmem:[#allocation8] sm:$0xff]
        %v2549 = vld [vmem:[#allocation8 + $0x8] sm:$0xff]
        %v2550 = vld [vmem:[#allocation8 + $0x10] sm:$0xff]
        %v2551 = vld [vmem:[#allocation8 + $0x18] sm:$0xff]
        %v2552 = vld [vmem:[#allocation8 + $0x20] sm:$0xff]
        %v2553 = vld [vmem:[#allocation8 + $0x28] sm:$0xff]
        %v2554 = vld [vmem:[#allocation8 + $0x30] sm:$0xff]
        %v2555 = vld [vmem:[#allocation8 + $0x38] sm:$0xff]
        %v2556 = vld [vmem:[#allocation8 + $0x40] sm:$0xff]
        %v2557 = vld [vmem:[#allocation8 + $0x48] sm:$0xff]
        %v2558 = vld [vmem:[#allocation8 + $0x50] sm:$0xff]
        %v2559 = vld [vmem:[#allocation8 + $0x58] sm:$0xff]
        %v2560 = vld [vmem:[#allocation8 + $0x60] sm:$0xff]
        %v2561 = vld [vmem:[#allocation8 + $0x68] sm:$0xff]
        %v2562 = vld [vmem:[#allocation8 + $0x70] sm:$0xff]
        %v2563 = vld [vmem:[#allocation8 + $0x78] sm:$0xff]
        %v2564 = vld [vmem:[#allocation8 + $0x80] sm:$0xff]
        %v2565 = vld [vmem:[#allocation8 + $0x88] sm:$0xff]
        %v2566 = vld [vmem:[#allocation8 + $0x90] sm:$0xff]
        %v2567 = vld [vmem:[#allocation8 + $0x98] sm:$0xff]
        %v2568 = vld [vmem:[#allocation8 + $0xa0] sm:$0xff]
        %v2569 = vld [vmem:[#allocation8 + $0xa8] sm:$0xff]
        %v2570 = vld [vmem:[#allocation8 + $0xb0] sm:$0xff]
        %v2571 = vld [vmem:[#allocation8 + $0xb8] sm:$0xff]
        %v2572 = vld [vmem:[#allocation8 + $0xc0] sm:$0xff]
        %v2573 = vld [vmem:[#allocation8 + $0xc8] sm:$0xff]
        %v2574 = vld [vmem:[#allocation8 + $0xd0] sm:$0xff]
        %v2575 = vld [vmem:[#allocation8 + $0xd8] sm:$0xff]
        %v2576 = vld [vmem:[#allocation8 + $0xe0] sm:$0xff]
        %v2577 = vld [vmem:[#allocation8 + $0xe8] sm:$0xff]
        %v2578 = vld [vmem:[#allocation8 + $0xf0] sm:$0xff]
        %v2579 = vld [vmem:[#allocation8 + $0xf8] sm:$0xff]
        %2580 = vmatprep.subr.mxu0 %v2549
        %2581 = vmatpush1.msra.mxu0 %v2548
        %2582 = vmatprep.subr.mxu0 %v2551
        %2583 = vmatpush1.msra.mxu0 %v2550
        %2584 = vmatprep.subr.mxu0 %v2553
        %2585 = vmatpush1.msra.mxu0 %v2552
        %2586 = vmatprep.subr.mxu0 %v2555
        %2587 = vmatpush1.msra.mxu0 %v2554
        %2588 = vmatprep.subr.mxu0 %v2557
        %2589 = vmatpush1.msra.mxu0 %v2556
        %2590 = vmatprep.subr.mxu0 %v2559
        %2591 = vmatpush1.msra.mxu0 %v2558
        %2592 = vmatprep.subr.mxu0 %v2561
        %2593 = vmatpush1.msra.mxu0 %v2560
        %2594 = vmatprep.subr.mxu0 %v2563
        %2595 = vmatpush1.msra.mxu0 %v2562
        %2596 = vmatprep.subr.mxu0 %v2565
        %2597 = vmatpush1.msra.mxu0 %v2564
        %2598 = vmatprep.subr.mxu0 %v2567
        %2599 = vmatpush1.msra.mxu0 %v2566
        %2600 = vmatprep.subr.mxu0 %v2569
        %2601 = vmatpush1.msra.mxu0 %v2568
        %2602 = vmatprep.subr.mxu0 %v2571
        %2603 = vmatpush1.msra.mxu0 %v2570
        %2604 = vmatprep.subr.mxu0 %v2573
        %2605 = vmatpush1.msra.mxu0 %v2572
        %2606 = vmatprep.subr.mxu0 %v2575
        %2607 = vmatpush1.msra.mxu0 %v2574
        %2608 = vmatprep.subr.mxu0 %v2577
        %2609 = vmatpush1.msra.mxu0 %v2576
        %2610 = vmatprep.subr.mxu0 %v2579
        %2611 = vmatpush1.msra.mxu0 %v2578
        %2612 = vmatprep.subr.mxu0 0.0
        %2613 = vmatpush1.msra.mxu0 0.0
        %2614 = vmatprep.subr.mxu0 0.0
        %2615 = vmatpush1.msra.mxu0 0.0
        %2616 = vmatprep.subr.mxu0 0.0
        %2617 = vmatpush1.msra.mxu0 0.0
        %2618 = vmatprep.subr.mxu0 0.0
        %2619 = vmatpush1.msra.mxu0 0.0
        %2620 = vmatprep.subr.mxu0 0.0
        %2621 = vmatpush1.msra.mxu0 0.0
        %2622 = vmatprep.subr.mxu0 0.0
        %2623 = vmatpush1.msra.mxu0 0.0
        %2624 = vmatprep.subr.mxu0 0.0
        %2625 = vmatpush1.msra.mxu0 0.0
        %2626 = vmatprep.subr.mxu0 0.0
        %2627 = vmatpush1.msra.mxu0 0.0
        %2628 = vmatprep.subr.mxu0 0.0
        %2629 = vmatpush1.msra.mxu0 0.0
        %2630 = vmatprep.subr.mxu0 0.0
        %2631 = vmatpush1.msra.mxu0 0.0
        %2632 = vmatprep.subr.mxu0 0.0
        %2633 = vmatpush1.msra.mxu0 0.0
        %2634 = vmatprep.subr.mxu0 0.0
        %2635 = vmatpush1.msra.mxu0 0.0
        %2636 = vmatprep.subr.mxu0 0.0
        %2637 = vmatpush1.msra.mxu0 0.0
        %2638 = vmatprep.subr.mxu0 0.0
        %2639 = vmatpush1.msra.mxu0 0.0
        %2640 = vmatprep.subr.mxu0 0.0
        %2641 = vmatpush1.msra.mxu0 0.0
        %2642 = vmatprep.subr.mxu0 0.0
        %2643 = vmatpush1.msra.mxu0 0.0
        %2644 = vmatprep.mubr.f32.mxu0 0.0
        %2645 = vmatmul.mubr.f32.gmra.mrb[0].mxu0 %v2517
        %v2646 = vpop.f32.mrb[0].mxu0
        %v2647 = vadd.f32 0.0, %v2646
        %v2648 = vpop.f32.mrb[0].mxu0
        %v2649 = vadd.f32 0.0, %v2648
        %2650 = vmatprep.mubr.f32.mxu0 0.0
        %2651 = vmatmul.mubr.f32.gmra.mrb[0].mxu0 %v2519
        %v2652 = vpop.f32.mrb[0].mxu0
        %v2653 = vadd.f32 0.0, %v2652
        %v2654 = vpop.f32.mrb[0].mxu0
        %v2655 = vadd.f32 0.0, %v2654
        %2656 = vmatprep.mubr.f32.mxu0 0.0
        %2657 = vmatmul.mubr.f32.gmra.mrb[0].mxu0 %v2521
        %v2658 = vpop.f32.mrb[0].mxu0
        %v2659 = vadd.f32 0.0, %v2658
        %v2660 = vpop.f32.mrb[0].mxu0
        %v2661 = vadd.f32 0.0, %v2660
        %2662 = vmatprep.mubr.f32.mxu0 0.0
        %2663 = vmatmul.mubr.f32.gmra.mrb[0].mxu0 %v2523
        %v2664 = vpop.f32.mrb[0].mxu0
        %v2665 = vadd.f32 0.0, %v2664
        %v2666 = vpop.f32.mrb[0].mxu0
        %v2667 = vadd.f32 0.0, %v2666
        %2668 = vmatprep.mubr.f32.mxu0 0.0
        %2669 = vmatmul.mubr.f32.gmra.mrb[0].mxu0 %v2525
        %v2670 = vpop.f32.mrb[0].mxu0
        %v2671 = vadd.f32 0.0, %v2670
        %v2672 = vpop.f32.mrb[0].mxu0
        %v2673 = vadd.f32 0.0, %v2672
        %2674 = vmatprep.mubr.f32.mxu0 0.0
        %2675 = vmatmul.mubr.f32.gmra.mrb[0].mxu0 %v2527
        %v2676 = vpop.f32.mrb[0].mxu0
        %v2677 = vadd.f32 0.0, %v2676
        %v2678 = vpop.f32.mrb[0].mxu0
        %v2679 = vadd.f32 0.0, %v2678
        %2680 = vmatprep.mubr.f32.mxu0 0.0
        %2681 = vmatmul.mubr.f32.gmra.mrb[0].mxu0 %v2529
        %v2682 = vpop.f32.mrb[0].mxu0
        %v2683 = vadd.f32 0.0, %v2682
        %v2684 = vpop.f32.mrb[0].mxu0
        %v2685 = vadd.f32 0.0, %v2684
        %2686 = vmatprep.mubr.f32.mxu0 0.0
        %2687 = vmatmul.mubr.f32.gmra.mrb[0].mxu0 %v2531
        %v2688 = vpop.f32.mrb[0].mxu0
        %v2689 = vadd.f32 0.0, %v2688
        %v2690 = vpop.f32.mrb[0].mxu0
        %v2691 = vadd.f32 0.0, %v2690
        %2692 = vmatprep.mubr.f32.mxu0 0.0
        %2693 = vmatmul.mubr.f32.gmra.mrb[0].mxu0 %v2533
        %v2694 = vpop.f32.mrb[0].mxu0
        %v2695 = vadd.f32 0.0, %v2694
        %v2696 = vpop.f32.mrb[0].mxu0
        %v2697 = vadd.f32 0.0, %v2696
        %2698 = vmatprep.mubr.f32.mxu0 0.0
        %2699 = vmatmul.mubr.f32.gmra.mrb[0].mxu0 %v2535
        %v2700 = vpop.f32.mrb[0].mxu0
        %v2701 = vadd.f32 0.0, %v2700
        %v2702 = vpop.f32.mrb[0].mxu0
        %v2703 = vadd.f32 0.0, %v2702
        %2704 = vmatprep.mubr.f32.mxu0 0.0
        %2705 = vmatmul.mubr.f32.gmra.mrb[0].mxu0 %v2537
        %v2706 = vpop.f32.mrb[0].mxu0
        %v2707 = vadd.f32 0.0, %v2706
        %v2708 = vpop.f32.mrb[0].mxu0
        %v2709 = vadd.f32 0.0, %v2708
        %2710 = vmatprep.mubr.f32.mxu0 0.0
        %2711 = vmatmul.mubr.f32.gmra.mrb[0].mxu0 %v2539
        %v2712 = vpop.f32.mrb[0].mxu0
        %v2713 = vadd.f32 0.0, %v2712
        %v2714 = vpop.f32.mrb[0].mxu0
        %v2715 = vadd.f32 0.0, %v2714
        %2716 = vmatprep.mubr.f32.mxu0 0.0
        %2717 = vmatmul.mubr.f32.gmra.mrb[0].mxu0 %v2541
        %v2718 = vpop.f32.mrb[0].mxu0
        %v2719 = vadd.f32 0.0, %v2718
        %v2720 = vpop.f32.mrb[0].mxu0
        %v2721 = vadd.f32 0.0, %v2720
        %2722 = vmatprep.mubr.f32.mxu0 0.0
        %2723 = vmatmul.mubr.f32.gmra.mrb[0].mxu0 %v2543
        %v2724 = vpop.f32.mrb[0].mxu0
        %v2725 = vadd.f32 0.0, %v2724
        %v2726 = vpop.f32.mrb[0].mxu0
        %v2727 = vadd.f32 0.0, %v2726
        %2728 = vmatprep.mubr.f32.mxu0 0.0
        %2729 = vmatmul.mubr.f32.gmra.mrb[0].mxu0 %v2545
        %v2730 = vpop.f32.mrb[0].mxu0
        %v2731 = vadd.f32 0.0, %v2730
        %v2732 = vpop.f32.mrb[0].mxu0
        %v2733 = vadd.f32 0.0, %v2732
        %2734 = vmatprep.mubr.f32.mxu0 0.0
        %2735 = vmatmul.mubr.f32.gmra.mrb[0].mxu0 %v2547
        %v2736 = vpop.f32.mrb[0].mxu0
        %v2737 = vadd.f32 0.0, %v2736
        %v2738 = vpop.f32.mrb[0].mxu0
        %v2739 = vadd.f32 0.0, %v2738
        %2740 = vdwg.mxu0
        %v2741 = vmul.f32 %v2244, %v2647
        %v2742 = vmul.f32 %v2246, %v2649
        %v2743 = vmul.f32 %v2248, %v2653
        %v2744 = vmul.f32 %v2250, %v2655
        %v2745 = vmul.f32 %v2252, %v2659
        %v2746 = vmul.f32 %v2254, %v2661
        %v2747 = vmul.f32 %v2256, %v2665
        %v2748 = vmul.f32 %v2258, %v2667
        %v2749 = vmul.f32 %v2260, %v2671
        %v2750 = vmul.f32 %v2262, %v2673
        %v2751 = vmul.f32 %v2264, %v2677
        %v2752 = vmul.f32 %v2266, %v2679
        %v2753 = vmul.f32 %v2268, %v2683
        %v2754 = vmul.f32 %v2270, %v2685
        %v2755 = vmul.f32 %v2272, %v2689
        %v2756 = vmul.f32 %v2274, %v2691
        %v2757 = vmul.f32 %v2276, %v2695
        %v2758 = vmul.f32 %v2278, %v2697
        %v2759 = vmul.f32 %v2280, %v2701
        %v2760 = vmul.f32 %v2282, %v2703
        %v2761 = vmul.f32 %v2284, %v2707
        %v2762 = vmul.f32 %v2286, %v2709
        %v2763 = vmul.f32 %v2288, %v2713
        %v2764 = vmul.f32 %v2290, %v2715
        %v2765 = vmul.f32 %v2292, %v2719
        %v2766 = vmul.f32 %v2294, %v2721
        %v2767 = vmul.f32 %v2296, %v2725
        %v2768 = vmul.f32 %v2298, %v2727
        %v2769 = vmul.f32 %v2300, %v2731
        %v2770 = vmul.f32 %v2302, %v2733
        %v2771 = vmul.f32 %v2304, %v2737
        %v2772 = vmul.f32 %v2306, %v2739
        %v2773 = vsel %vm2209, %v2741, %v1578
        %v2774 = vsel %vm2210, %v2742, %v1580
        %v2775 = vsel %vm2209, %v2743, %v1582
        %v2776 = vsel %vm2210, %v2744, %v1584
        %v2777 = vsel %vm2209, %v2745, %v1588
        %v2778 = vsel %vm2210, %v2746, %v1590
        %v2779 = vsel %vm2209, %v2747, %v1592
        %v2780 = vsel %vm2210, %v2748, %v1594
        %v2781 = vsel %vm2209, %v2749, %v1598
        %v2782 = vsel %vm2210, %v2750, %v1600
        %v2783 = vsel %vm2209, %v2751, %v1602
        %v2784 = vsel %vm2210, %v2752, %v1604
        %v2785 = vsel %vm2209, %v2753, %v1608
        %v2786 = vsel %vm2210, %v2754, %v1610
        %v2787 = vsel %vm2209, %v2755, %v1612
        %v2788 = vsel %vm2210, %v2756, %v1614
        %v2789 = vsel %vm2209, %v2757, %v1618
        %v2790 = vsel %vm2210, %v2758, %v1620
        %v2791 = vsel %vm2209, %v2759, %v1622
        %v2792 = vsel %vm2210, %v2760, %v1624
        %v2793 = vsel %vm2209, %v2761, %v1628
        %v2794 = vsel %vm2210, %v2762, %v1630
        %v2795 = vsel %vm2209, %v2763, %v1632
        %v2796 = vsel %vm2210, %v2764, %v1634
        %v2797 = vsel %vm2209, %v2765, %v1638
        %v2798 = vsel %vm2210, %v2766, %v1640
        %v2799 = vsel %vm2209, %v2767, %v1642
        %v2800 = vsel %vm2210, %v2768, %v1644
        %v2801 = vsel %vm2209, %v2769, %v1648
        %v2802 = vsel %vm2210, %v2770, %v1650
        %v2803 = vsel %vm2209, %v2771, %v1652
        %v2804 = vsel %vm2210, %v2772, %v1654
        %2805 = vst [vmem:[%s328] sm:$0xff] %v2773
        %2806 = vst [vmem:[%s328 + $0x8] sm:$0xff] %v2774
        %2807 = vst [vmem:[%s328 + $0x10] sm:$0xff] %v2775
        %2808 = vst [vmem:[%s328 + $0x18] sm:$0xff] %v2776
        %2809 = vst [vmem:[%s328 + $0x20] sm:$0xff] %v2777
        %2810 = vst [vmem:[%s328 + $0x28] sm:$0xff] %v2778
        %2811 = vst [vmem:[%s328 + $0x30] sm:$0xff] %v2779
        %2812 = vst [vmem:[%s328 + $0x38] sm:$0xff] %v2780
        %2813 = vst [vmem:[%s328 + $0x40] sm:$0xff] %v2781
        %2814 = vst [vmem:[%s328 + $0x48] sm:$0xff] %v2782
        %2815 = vst [vmem:[%s328 + $0x50] sm:$0xff] %v2783
        %2816 = vst [vmem:[%s328 + $0x58] sm:$0xff] %v2784
        %2817 = vst [vmem:[%s328 + $0x60] sm:$0xff] %v2785
        %2818 = vst [vmem:[%s328 + $0x68] sm:$0xff] %v2786
        %2819 = vst [vmem:[%s328 + $0x70] sm:$0xff] %v2787
        %2820 = vst [vmem:[%s328 + $0x78] sm:$0xff] %v2788
        %2821 = vst [vmem:[%s328 + $0x80] sm:$0xff] %v2789
        %2822 = vst [vmem:[%s328 + $0x88] sm:$0xff] %v2790
        %2823 = vst [vmem:[%s328 + $0x90] sm:$0xff] %v2791
        %2824 = vst [vmem:[%s328 + $0x98] sm:$0xff] %v2792
        %2825 = vst [vmem:[%s328 + $0xa0] sm:$0xff] %v2793
        %2826 = vst [vmem:[%s328 + $0xa8] sm:$0xff] %v2794
        %2827 = vst [vmem:[%s328 + $0xb0] sm:$0xff] %v2795
        %2828 = vst [vmem:[%s328 + $0xb8] sm:$0xff] %v2796
        %2829 = vst [vmem:[%s328 + $0xc0] sm:$0xff] %v2797
        %2830 = vst [vmem:[%s328 + $0xc8] sm:$0xff] %v2798
        %2831 = vst [vmem:[%s328 + $0xd0] sm:$0xff] %v2799
        %2832 = vst [vmem:[%s328 + $0xd8] sm:$0xff] %v2800
        %2833 = vst [vmem:[%s328 + $0xe0] sm:$0xff] %v2801
        %2834 = vst [vmem:[%s328 + $0xe8] sm:$0xff] %v2802
        %2835 = vst [vmem:[%s328 + $0xf0] sm:$0xff] %v2803
        %2836 = vst [vmem:[%s328 + $0xf8] sm:$0xff] %v2804
        %s2837 = sand.u32 %s164, 1
        %s2838 = scalar_lea.sflag [#allocation4], %s2837
        %s2839 = sand.u32 %s164, 1
        %s2840 = smul.addr %s2839, 256
        %s2841 = scalar_lea.vmem [#allocation11], %s2840
        // Predicated region
        $region65: #{tpu_custom_call.1} parent=43 // pred_check
          %p2842 = pneg %p174
        $region66: #{tpu_custom_call.1} parent=43 // pred_check_branch
          %2844 = sbr.rel (%p2842) target = $region68
        $region67: #{tpu_custom_call.1} parent=43 // pred_region
          %s2845 = smul.u32 16, %s25
          %s2847 = ssub.s32 4096, 4096
          %2848 = vsyncadd %s2838, %s2847
          %s2849 = smul.addr %s2845, 2
          %s2850 = smul.addr %s2849, 128
          %s2851 = scalar_lea.hbm %s6, %s2850
          %s2852 = sshll.u32 %s2841, 4
          %s2853 = int_to_ptr.vmem [resolvable:$true] %s2852
          %2858 = dma.vmem_to_hbm [thread:$0]  %s2853, 4096, %s2851, %s2838, 256, 256, 16
        $region68: #{tpu_custom_call.1} parent=43 // pred_fallthru
          _
      $region44: #{tpu_custom_call.1} parent=5 // pred_fallthru
        _
      %p2859 = scmp.le.s32.totalorder 2, %s20
      // Predicated region
      $region69: #{tpu_custom_call.1} parent=5 // pred_check
        %p2860 = pneg %p2859
      $region70: #{tpu_custom_call.1} parent=5 // pred_check_branch
        %2862 = sbr.rel (%p2860) target = $region72
      $region71: #{tpu_custom_call.1} parent=5 // pred_region
        %s2863 = ssub.s32 %s20, 2
        // Predicated region
        $region73: #{tpu_custom_call.1} parent=71 // pred_check
          %p2864 = pneg %p180
        $region74: #{tpu_custom_call.1} parent=71 // pred_check_branch
          %2866 = sbr.rel (%p2864) target = $region76
        $region75: #{tpu_custom_call.1} parent=71 // pred_region
          %s2867 = sand.u32 %s165, 1
          %s2868 = scalar_lea.sflag [#allocation4], %s2867
          %s2869 = sand.u32 %s165, 1
          %s2870 = smul.addr %s2869, 256
          %s2871 = scalar_lea.vmem [#allocation11], %s2870
          %2872 = dma.done %s2868, 4096
        $region76: #{tpu_custom_call.1} parent=71 // pred_fallthru
          _
      $region72: #{tpu_custom_call.1} parent=5 // pred_fallthru
        _
    $region6: #{tpu_custom_call.1} parent=1 // loop_footer
      %s24 = sadd.s32 1, %s20
    $region7: #{tpu_custom_call.1} parent=1 // loop_footer_branch
      %19 = sbr.rel target = $region3
    $region8: #{tpu_custom_call.1} parent=1 // loop_exit
      _
    %2873 = vsyncpa [#allocation3], 1
    %s2874 = scalar_lea.sflag [#allocation3], 1
    %2875 = vsyncpa %s2874, 1
    %2876 = vsyncpa [#allocation6], 1
    %2877 = vsyncpa [#allocation9], 1
    %2878 = vsyncpa [#allocation4], 1
    %s2879 = scalar_lea.sflag [#allocation4], 1
    %2880 = vsyncpa %s2879, 1

</llo_original>
